<compile_context>
chip_gen: v5e
topology: v5e:2x2
jax: 0.10.0
libtpu: 0.0.40
codegen_flags: <defaults>
</compile_context>

<pallas_src>
import jax
import jax.numpy as jnp
from jax.experimental import pallas as pl
from jax.experimental.pallas import tpu as pltpu


# ----------------------------------------------------------------------------
# Kernel 1: fused bidirectional encoder, grid=(S,).
#   Forward direction consumes timestep s, backward consumes timestep S-1-s.
#   h/c states live in the (resident, constant-index) final-state outputs.
# ----------------------------------------------------------------------------
def _encoder_kernel(xf_ref, xb_ref, wih_f, whh_f, b_f, wih_b, whh_b, b_b,
                    of_ref, ob_ref, hf_ref, cf_ref, hb_ref, cb_ref):
    @pl.when(pl.program_id(0) == 0)
    def _():
        hf_ref[...] = jnp.zeros_like(hf_ref)
        cf_ref[...] = jnp.zeros_like(cf_ref)
        hb_ref[...] = jnp.zeros_like(hb_ref)
        cb_ref[...] = jnp.zeros_like(cb_ref)

    def cell(x, h, c, wih, whh, b):
        # gates = x @ W_ih^T + h @ W_hh^T + (b_ih + b_hh); PyTorch order i,f,g,o
        gates = (jnp.dot(x, wih[...], preferred_element_type=jnp.float32)
                 + jnp.dot(h.astype(jnp.bfloat16), whh[...],
                           preferred_element_type=jnp.float32)
                 + b[...])
        H = h.shape[1]
        i = jax.nn.sigmoid(gates[:, 0:H])
        f = jax.nn.sigmoid(gates[:, H:2 * H])
        g = jnp.tanh(gates[:, 2 * H:3 * H])
        o = jax.nn.sigmoid(gates[:, 3 * H:4 * H])
        c_new = f * c + i * g
        return o * jnp.tanh(c_new), c_new

    h_f, c_f = cell(xf_ref[0], hf_ref[...], cf_ref[...], wih_f, whh_f, b_f)
    h_b, c_b = cell(xb_ref[0], hb_ref[...], cb_ref[...], wih_b, whh_b, b_b)

    hf_ref[...] = h_f
    cf_ref[...] = c_f
    hb_ref[...] = h_b
    cb_ref[...] = c_b
    of_ref[0] = h_f.astype(of_ref.dtype)
    ob_ref[0] = h_b.astype(ob_ref.dtype)


def encoder_forward(embedded, wih_f, whh_f, b_f, wih_b, whh_b, b_b):
    S, B, E = embedded.shape
    H2 = whh_f.shape[0]
    c2 = lambda s: (0, 0)

    return pl.pallas_call(
        _encoder_kernel,
        grid=(S,),
        in_specs=[
            pl.BlockSpec((1, B, E), lambda s: (s, 0, 0)),            # fwd read
            pl.BlockSpec((1, B, E), lambda s: (S - 1 - s, 0, 0)),    # bwd read
            pl.BlockSpec(wih_f.shape, c2),
            pl.BlockSpec(whh_f.shape, c2),
            pl.BlockSpec(b_f.shape, c2),
            pl.BlockSpec(wih_b.shape, c2),
            pl.BlockSpec(whh_b.shape, c2),
            pl.BlockSpec(b_b.shape, c2),
        ],
        out_specs=(
            pl.BlockSpec((1, B, H2), lambda s: (s, 0, 0)),           # out_f
            pl.BlockSpec((1, B, H2), lambda s: (S - 1 - s, 0, 0)),   # out_b
            pl.BlockSpec((B, H2), c2),                               # h_f
            pl.BlockSpec((B, H2), c2),                               # c_f
            pl.BlockSpec((B, H2), c2),                               # h_b
            pl.BlockSpec((B, H2), c2),                               # c_b
        ),
        out_shape=(
            jax.ShapeDtypeStruct((S, B, H2), jnp.bfloat16),
            jax.ShapeDtypeStruct((S, B, H2), jnp.bfloat16),
            jax.ShapeDtypeStruct((B, H2), jnp.float32),
            jax.ShapeDtypeStruct((B, H2), jnp.float32),
            jax.ShapeDtypeStruct((B, H2), jnp.float32),
            jax.ShapeDtypeStruct((B, H2), jnp.float32),
        ),
        compiler_params=pltpu.CompilerParams(
            dimension_semantics=("arbitrary",),
            vmem_limit_bytes=48 * 1024 * 1024,
        ),
    )(embedded, embedded, wih_f, whh_f, b_f, wih_b, whh_b, b_b)


# ----------------------------------------------------------------------------
# Kernel 2: fused greedy decoder, grid=(T,).
#   Per step: LSTMCell -> Luong 'general' attention (MXU einsums) -> tanh
#   combine -> generator logits (lane-dense, vocab padded to 128) -> greedy
#   argmax -> next-token embedding via one-hot @ table (MXU).
#   h/c/x carried across grid steps in VMEM scratch.
# ----------------------------------------------------------------------------
def _decoder_kernel(x0_ref, h0_ref, c0_ref, enc_ref, emb_ref,
                    w_ih_ref, w_hh_ref, b_ref,
                    w_in_ref, w_out_ref, w_gen_ref, b_gen_ref,
                    logits_ref,
                    h_scr, c_scr, x_scr):
    B, Hm = h_scr.shape
    V = emb_ref.shape[0]

    @pl.when(pl.program_id(0) == 0)
    def _():
        h_scr[...] = h0_ref[...]
        c_scr[...] = c0_ref[...]
        x_scr[...] = x0_ref[...]

    x = x_scr[...]                           # (B, E) bf16
    h = h_scr[...]                           # (B, Hm) f32
    c = c_scr[...]

    # --- LSTMCell.  The attn_vector half of the input is identically zero in
    #     this model, so only the embedding slice of W_ih is used. ---
    gates = (jnp.dot(x, w_ih_ref[...], preferred_element_type=jnp.float32)
             + jnp.dot(h.astype(jnp.bfloat16), w_hh_ref[...],
                       preferred_element_type=jnp.float32)
             + b_ref[...])
    i = jax.nn.sigmoid(gates[:, 0:Hm])
    f = jax.nn.sigmoid(gates[:, Hm:2 * Hm])
    g = jnp.tanh(gates[:, 2 * Hm:3 * Hm])
    o = jax.nn.sigmoid(gates[:, 3 * Hm:4 * Hm])
    c_new = f * c + i * g
    d_h = o * jnp.tanh(c_new)
    h_scr[...] = d_h
    c_scr[...] = c_new

    # --- Attn (method='general'), target length == 1, on the MXU ---
    d_h_b = d_h.astype(jnp.bfloat16)
    enc = enc_ref[...]                                            # (B, S, Hm)
    q = jnp.dot(d_h_b, w_in_ref[...],
                preferred_element_type=jnp.float32)               # linear_in
    q3 = q.astype(jnp.bfloat16)[:, None, :]                       # (B, 1, Hm)
    align = jnp.einsum('bqh,bsh->bqs', q3, enc,
                       preferred_element_type=jnp.float32)        # (B, 1, S)
    align = align - jnp.max(align, axis=-1, keepdims=True)
    p = jnp.exp(align)
    p = p * pl.reciprocal(jnp.sum(p, axis=-1, keepdims=True), approx=True)
    ctx = jnp.einsum('bqs,bsh->bqh', p.astype(jnp.bfloat16), enc,
                     preferred_element_type=jnp.float32)[:, 0, :]  # (B, Hm)

    # linear_out([ctx, d_h]) without explicit concat: split the (2H, H) weight.
    w_out = w_out_ref[...]
    attn_h = jnp.tanh(
        jnp.dot(ctx.astype(jnp.bfloat16), w_out[0:Hm, :],
                preferred_element_type=jnp.float32)
        + jnp.dot(d_h_b, w_out[Hm:2 * Hm, :],
                  preferred_element_type=jnp.float32))
    # dropout is identity in eval mode.

    # --- generator: Linear(H -> Vp), Vp a multiple of 128 (lane-dense) ---
    logits = (jnp.dot(attn_h.astype(jnp.bfloat16), w_gen_ref[...],
                      preferred_element_type=jnp.float32)
              + b_gen_ref[...])                                    # (B, Vp)
    logits_ref[0] = logits

    # --- greedy argmax (lowest-index tie-break) -> next-token embedding ---
    Vp = logits.shape[1]
    col = jax.lax.broadcasted_iota(jnp.int32, logits.shape, 1)
    is_max = logits == jnp.max(logits, axis=-1, keepdims=True)
    nxt = jnp.min(jnp.where(is_max, col, Vp), axis=-1, keepdims=True)  # (B, 1)
    emb_col = jax.lax.broadcasted_iota(jnp.int32, (B, V), 1)
    onehot = (emb_col == nxt).astype(jnp.bfloat16)                     # (B, V)
    x_scr[...] = jnp.dot(onehot, emb_ref[...],
                         preferred_element_type=jnp.float32
                         ).astype(jnp.bfloat16)


def decoder_forward(x0, h0, c0, enc_bm, trg_emb,
                    w_ih, w_hh, b, w_in, w_out, w_gen, b_gen, T):
    B, Hm = h0.shape
    _, S, _ = enc_bm.shape
    E = x0.shape[1]
    Vp = w_gen.shape[1]
    c2 = lambda t: (0, 0)
    c3 = lambda t: (0, 0, 0)

    return pl.pallas_call(
        _decoder_kernel,
        grid=(T,),
        in_specs=[
            pl.BlockSpec((B, E), c2),            # x0 (sos embedding)
            pl.BlockSpec((B, Hm), c2),           # h0
            pl.BlockSpec((B, Hm), c2),           # c0
            pl.BlockSpec((B, S, Hm), c3),        # encoder outputs (resident)
            pl.BlockSpec(trg_emb.shape, c2),     # target embedding table
            pl.BlockSpec(w_ih.shape, c2),
            pl.BlockSpec(w_hh.shape, c2),
            pl.BlockSpec(b.shape, c2),
            pl.BlockSpec(w_in.shape, c2),
            pl.BlockSpec(w_out.shape, c2),
            pl.BlockSpec(w_gen.shape, c2),
            pl.BlockSpec(b_gen.shape, c2),
        ],
        out_specs=pl.BlockSpec((1, B, Vp), lambda t: (t, 0, 0)),
        out_shape=jax.ShapeDtypeStruct((T, B, Vp), jnp.float32),
        scratch_shapes=[
            pltpu.VMEM((B, Hm), jnp.float32),    # h carry
            pltpu.VMEM((B, Hm), jnp.float32),    # c carry
            pltpu.VMEM((B, E), jnp.bfloat16),    # next-input embedding carry
        ],
        compiler_params=pltpu.CompilerParams(
            dimension_semantics=("arbitrary",),
            vmem_limit_bytes=48 * 1024 * 1024,
        ),
    )(x0, h0, c0, enc_bm, trg_emb, w_ih, w_hh, b, w_in, w_out, w_gen, b_gen)


# ----------------------------------------------------------------------------
# Parameter init: reproduces reset_parameters() (all uniform(-0.1, 0.1)),
# then pre-transposes once, casts matmul weights to bf16, keeps biases f32,
# and pads the generator vocab to a multiple of 128.
# ----------------------------------------------------------------------------
def init_params(key, src_vocab_size, trg_vocab_size, emb_size, hidden_size):
    H = hidden_size
    H2 = H // 2
    E = emb_size
    Vp = ((trg_vocab_size + 127) // 128) * 128
    ks = jax.random.split(key, 24)
    u = lambda k, s: jax.random.uniform(k, s, jnp.float32, -0.1, 0.1)
    bf = lambda a: a.astype(jnp.bfloat16)

    p = {}
    # encoder (bidirectional LSTM)
    p['src_emb']   = bf(u(ks[0], (src_vocab_size, E)))
    p['enc_wih_f'] = bf(u(ks[1], (4 * H2, E)).T)                      # (E, 4H2)
    p['enc_whh_f'] = bf(u(ks[2], (4 * H2, H2)).T)                     # (H2, 4H2)
    p['enc_b_f']   = (u(ks[3], (4 * H2,)) + u(ks[4], (4 * H2,))).reshape(1, -1)
    p['enc_wih_b'] = bf(u(ks[5], (4 * H2, E)).T)
    p['enc_whh_b'] = bf(u(ks[6], (4 * H2, H2)).T)
    p['enc_b_b']   = (u(ks[7], (4 * H2,)) + u(ks[8], (4 * H2,))).reshape(1, -1)
    # decoder LSTMCell: input = [embedding, attn_vector]; the attn_vector half
    # multiplies an identically-zero input and is dropped.
    dec_wih = u(ks[9], (4 * H, E + H))
    p['trg_emb']   = bf(u(ks[10], (trg_vocab_size, E)))
    p['dec_wih_e'] = bf(dec_wih[:, :E].T)                             # (E, 4H)
    p['dec_whh']   = bf(u(ks[11], (4 * H, H)).T)                      # (H, 4H)
    p['dec_b']     = (u(ks[12], (4 * H,)) + u(ks[13], (4 * H,))).reshape(1, -1)
    # attention (method='general', no bias)
    p['attn_w_in']  = bf(u(ks[14], (H, H)).T)                         # (H, H)
    p['attn_w_out'] = bf(u(ks[15], (H, 2 * H)).T)                     # (2H, H)
    # generator Linear(H -> V), vocab padded to Vp for lane-dense stores; the
    # padded bias is -1e9 so greedy decoding never selects a padded token.
    gen_w = u(ks[16], (trg_vocab_size, H))
    gen_b = u(ks[17], (trg_vocab_size,))
    gw = jnp.zeros((H, Vp), jnp.float32).at[:, :trg_vocab_size].set(gen_w.T)
    gb = jnp.full((1, Vp), -1e9, jnp.float32).at[0, :trg_vocab_size].set(gen_b)
    p['gen_w'] = bf(gw)
    p['gen_b'] = gb
    return p


# ----------------------------------------------------------------------------
# Full NMT forward: one encoder kernel + one decoder kernel.
# ----------------------------------------------------------------------------
def nmt_forward(params, src_batch, trg_batch, sos_idx, trg_vocab_size):
    S, B = src_batch.shape
    T = trg_batch.shape[0]
    E = params['src_emb'].shape[1]

    # EncoderRNN: embedding lookup once, then one fused bidirectional kernel.
    embedded = jnp.take(params['src_emb'], src_batch, axis=0)       # (S, B, E)
    out_f, out_b, h_f, c_f, h_b, c_b = encoder_forward(
        embedded,
        params['enc_wih_f'], params['enc_whh_f'], params['enc_b_f'],
        params['enc_wih_b'], params['enc_whh_b'], params['enc_b_b'])

    enc_bm = jnp.transpose(jnp.concatenate([out_f, out_b], axis=2),
                           (1, 0, 2))                               # (B, S, Hm)
    d_h = jnp.concatenate([h_f, h_b], axis=1)                       # (B, Hm)
    d_c = jnp.concatenate([c_f, c_b], axis=1)

    # <s> embedding as the step-0 decoder input (attn_vector stays zero: the
    # reference decoder returns its input attn_vector unchanged).
    x0 = jnp.broadcast_to(params['trg_emb'][sos_idx], (B, E))

    logits_padded = decoder_forward(
        x0, d_h, d_c, enc_bm, params['trg_emb'],
        params['dec_wih_e'], params['dec_whh'], params['dec_b'],
        params['attn_w_in'], params['attn_w_out'],
        params['gen_w'], params['gen_b'], T)
    return logits_padded[:, :, :trg_vocab_size]                     # (T, B, V)


if __name__ == "__main__":
    # Small, deterministic configuration.
    SRC_VOCAB = 24
    TRG_VOCAB = 28
    EMB = 16
    HIDDEN = 32          # bidirectional encoder -> 16 per direction
    SRC_LEN = 8
    TRG_LEN = 6
    BATCH = 2
    SOS_IDX = 2          # stand-in for trg_vocab.stoi['<s>']

    key = jax.random.PRNGKey(0)
    kp, ks, kt = jax.random.split(key, 3)
    params = init_params(kp, SRC_VOCAB, TRG_VOCAB, EMB, HIDDEN)

    src_batch = jax.random.randint(ks, (SRC_LEN, BATCH), 0, SRC_VOCAB, jnp.int32)
    trg_batch = jax.random.randint(kt, (TRG_LEN, BATCH), 0, TRG_VOCAB, jnp.int32)

    fwd = jax.jit(lambda p, s, t: nmt_forward(p, s, t, SOS_IDX, TRG_VOCAB))
    out = fwd(params, src_batch, trg_batch)
    out = jax.block_until_ready(out)

    assert out.shape == (TRG_LEN, BATCH, TRG_VOCAB), out.shape
    assert bool(jnp.all(jnp.isfinite(out)))
    print("KERNEL_OK")
</pallas_src>

<mosaic_0001>
module attributes {stable_mosaic.version = 11 : i64} {
  func.func @_encoder_kernel(%arg0: i32, %arg1: memref<1x2x16xbf16, #tpu.memory_space<vmem>>, %arg2: memref<1x2x16xbf16, #tpu.memory_space<vmem>>, %arg3: memref<16x64xbf16, #tpu.memory_space<vmem>>, %arg4: memref<16x64xbf16, #tpu.memory_space<vmem>>, %arg5: memref<1x64xf32, #tpu.memory_space<vmem>>, %arg6: memref<16x64xbf16, #tpu.memory_space<vmem>>, %arg7: memref<16x64xbf16, #tpu.memory_space<vmem>>, %arg8: memref<1x64xf32, #tpu.memory_space<vmem>>, %arg9: memref<1x2x16xbf16, #tpu.memory_space<vmem>>, %arg10: memref<1x2x16xbf16, #tpu.memory_space<vmem>>, %arg11: memref<2x16xf32, #tpu.memory_space<vmem>>, %arg12: memref<2x16xf32, #tpu.memory_space<vmem>>, %arg13: memref<2x16xf32, #tpu.memory_space<vmem>>, %arg14: memref<2x16xf32, #tpu.memory_space<vmem>>) attributes {dimension_semantics = [#tpu.dimension_semantics<arbitrary>], iteration_bounds = array<i64: 8>, scalar_prefetch = 0 : i64, scratch_operands = 0 : i64, tpu.core_type = #tpu.core_type<tc>, window_params = [{transform_indices = @transform_0, window_bounds = array<i64: 1, 2, 16>}, {transform_indices = @transform_1, window_bounds = array<i64: 1, 2, 16>}, {pipeline_mode = #tpu.pipeline_mode<synchronous>, transform_indices = @transform_2, window_bounds = array<i64: 16, 64>}, {pipeline_mode = #tpu.pipeline_mode<synchronous>, transform_indices = @transform_3, window_bounds = array<i64: 16, 64>}, {pipeline_mode = #tpu.pipeline_mode<synchronous>, transform_indices = @transform_4, window_bounds = array<i64: 1, 64>}, {pipeline_mode = #tpu.pipeline_mode<synchronous>, transform_indices = @transform_5, window_bounds = array<i64: 16, 64>}, {pipeline_mode = #tpu.pipeline_mode<synchronous>, transform_indices = @transform_6, window_bounds = array<i64: 16, 64>}, {pipeline_mode = #tpu.pipeline_mode<synchronous>, transform_indices = @transform_7, window_bounds = array<i64: 1, 64>}, {transform_indices = @transform_8, window_bounds = array<i64: 1, 2, 16>}, {transform_indices = @transform_9, window_bounds = array<i64: 1, 2, 16>}, {pipeline_mode = #tpu.pipeline_mode<synchronous>, transform_indices = @transform_10, window_bounds = array<i64: 2, 16>}, {pipeline_mode = #tpu.pipeline_mode<synchronous>, transform_indices = @transform_11, window_bounds = array<i64: 2, 16>}, {pipeline_mode = #tpu.pipeline_mode<synchronous>, transform_indices = @transform_12, window_bounds = array<i64: 2, 16>}, {pipeline_mode = #tpu.pipeline_mode<synchronous>, transform_indices = @transform_13, window_bounds = array<i64: 2, 16>}]} {
    %c0_i32 = arith.constant 0 : i32
    %0 = arith.cmpi eq, %arg0, %c0_i32 : i32
    %1 = arith.extui %0 : i1 to i32
    %c0_i32_0 = arith.constant 0 : i32
    %2 = arith.cmpi ne, %1, %c0_i32_0 : i32
    scf.if %2 {
      %cst_49 = arith.constant 0.000000e+00 : f32
      %91 = vector.broadcast %cst_49 : f32 to vector<2x16xf32>
      %c0_50 = arith.constant 0 : index
      %c0_51 = arith.constant 0 : index
      %92 = vector.load %arg11[%c0_50, %c0_51] : memref<2x16xf32, #tpu.memory_space<vmem>>, vector<2x16xf32>
      tpu.vector_store %arg11[%c0_50, %c0_51], %91 {strides = array<i32>} : memref<2x16xf32, #tpu.memory_space<vmem>>, vector<2x16xf32>,
      %cst_52 = arith.constant 0.000000e+00 : f32
      %93 = vector.broadcast %cst_52 : f32 to vector<2x16xf32>
      %c0_53 = arith.constant 0 : index
      %c0_54 = arith.constant 0 : index
      %94 = vector.load %arg12[%c0_53, %c0_54] : memref<2x16xf32, #tpu.memory_space<vmem>>, vector<2x16xf32>
      tpu.vector_store %arg12[%c0_53, %c0_54], %93 {strides = array<i32>} : memref<2x16xf32, #tpu.memory_space<vmem>>, vector<2x16xf32>,
      %cst_55 = arith.constant 0.000000e+00 : f32
      %95 = vector.broadcast %cst_55 : f32 to vector<2x16xf32>
      %c0_56 = arith.constant 0 : index
      %c0_57 = arith.constant 0 : index
      %96 = vector.load %arg13[%c0_56, %c0_57] : memref<2x16xf32, #tpu.memory_space<vmem>>, vector<2x16xf32>
      tpu.vector_store %arg13[%c0_56, %c0_57], %95 {strides = array<i32>} : memref<2x16xf32, #tpu.memory_space<vmem>>, vector<2x16xf32>,
      %cst_58 = arith.constant 0.000000e+00 : f32
      %97 = vector.broadcast %cst_58 : f32 to vector<2x16xf32>
      %c0_59 = arith.constant 0 : index
      %c0_60 = arith.constant 0 : index
      %98 = vector.load %arg14[%c0_59, %c0_60] : memref<2x16xf32, #tpu.memory_space<vmem>>, vector<2x16xf32>
      tpu.vector_store %arg14[%c0_59, %c0_60], %97 {strides = array<i32>} : memref<2x16xf32, #tpu.memory_space<vmem>>, vector<2x16xf32>,
    } else {
    }
    %c0 = arith.constant 0 : index
    %c0_1 = arith.constant 0 : index
    %c0_2 = arith.constant 0 : index
    %3 = vector.load %arg1[%c0, %c0_1, %c0_2] : memref<1x2x16xbf16, #tpu.memory_space<vmem>>, vector<1x2x16xbf16>
    %4 = vector.shape_cast %3 : vector<1x2x16xbf16> to vector<2x16xbf16>
    %c0_3 = arith.constant 0 : index
    %c0_4 = arith.constant 0 : index
    %5 = vector.load %arg11[%c0_3, %c0_4] : memref<2x16xf32, #tpu.memory_space<vmem>>, vector<2x16xf32>
    %c0_5 = arith.constant 0 : index
    %c0_6 = arith.constant 0 : index
    %6 = vector.load %arg12[%c0_5, %c0_6] : memref<2x16xf32, #tpu.memory_space<vmem>>, vector<2x16xf32>
    %c0_7 = arith.constant 0 : index
    %c0_8 = arith.constant 0 : index
    %7 = vector.load %arg3[%c0_7, %c0_8] : memref<16x64xbf16, #tpu.memory_space<vmem>>, vector<16x64xbf16>
    %cst = arith.constant dense<0.000000e+00> : vector<2x64xf32>
    %8 = tpu.matmul %4, %7, %cst {dimension_numbers = #tpu.dot_dimension_numbers<[1], [0], [0], [1], [0, 0, 1, 1], [], []>} : vector<2x16xbf16>, vector<16x64xbf16>, vector<2x64xf32> -> vector<2x64xf32>
    %9 = arith.truncf %5 : vector<2x16xf32> to vector<2x16xbf16>
    %c0_9 = arith.constant 0 : index
    %c0_10 = arith.constant 0 : index
    %10 = vector.load %arg4[%c0_9, %c0_10] : memref<16x64xbf16, #tpu.memory_space<vmem>>, vector<16x64xbf16>
    %cst_11 = arith.constant dense<0.000000e+00> : vector<2x64xf32>
    %11 = tpu.matmul %9, %10, %cst_11 {dimension_numbers = #tpu.dot_dimension_numbers<[1], [0], [0], [1], [0, 0, 1, 1], [], []>} : vector<2x16xbf16>, vector<16x64xbf16>, vector<2x64xf32> -> vector<2x64xf32>
    %12 = arith.addf %8, %11 : vector<2x64xf32>
    %c0_12 = arith.constant 0 : index
    %c0_13 = arith.constant 0 : index
    %13 = vector.load %arg5[%c0_12, %c0_13] : memref<1x64xf32, #tpu.memory_space<vmem>>, vector<1x64xf32>
    %14 = vector.broadcast %13 : vector<1x64xf32> to vector<2x64xf32>
    %15 = arith.addf %12, %14 : vector<2x64xf32>
    %16 = vector.extract_strided_slice %15 {offsets = [0, 0], sizes = [2, 16], strides = [1, 1]} : vector<2x64xf32> to vector<2x16xf32>
    %17 = arith.negf %16 : vector<2x16xf32>
    %18 = math.exp %17 : vector<2x16xf32>
    %cst_14 = arith.constant 1.000000e+00 : f32
    %19 = vector.broadcast %cst_14 : f32 to vector<2x16xf32>
    %20 = arith.addf %19, %18 : vector<2x16xf32>
    %21 = arith.divf %19, %20 : vector<2x16xf32>
    %22 = vector.extract_strided_slice %15 {offsets = [0, 16], sizes = [2, 16], strides = [1, 1]} : vector<2x64xf32> to vector<2x16xf32>
    %23 = arith.negf %22 : vector<2x16xf32>
    %24 = math.exp %23 : vector<2x16xf32>
    %cst_15 = arith.constant 1.000000e+00 : f32
    %25 = vector.broadcast %cst_15 : f32 to vector<2x16xf32>
    %26 = arith.addf %25, %24 : vector<2x16xf32>
    %27 = arith.divf %25, %26 : vector<2x16xf32>
    %28 = vector.extract_strided_slice %15 {offsets = [0, 32], sizes = [2, 16], strides = [1, 1]} : vector<2x64xf32> to vector<2x16xf32>
    %29 = math.tanh %28 : vector<2x16xf32>
    %30 = vector.extract_strided_slice %15 {offsets = [0, 48], sizes = [2, 16], strides = [1, 1]} : vector<2x64xf32> to vector<2x16xf32>
    %31 = arith.negf %30 : vector<2x16xf32>
    %32 = math.exp %31 : vector<2x16xf32>
    %cst_16 = arith.constant 1.000000e+00 : f32
    %33 = vector.broadcast %cst_16 : f32 to vector<2x16xf32>
    %34 = arith.addf %33, %32 : vector<2x16xf32>
    %35 = arith.divf %33, %34 : vector<2x16xf32>
    %36 = arith.mulf %27, %6 : vector<2x16xf32>
    %37 = arith.mulf %21, %29 : vector<2x16xf32>
    %38 = arith.addf %36, %37 : vector<2x16xf32>
    %39 = math.tanh %38 : vector<2x16xf32>
    %40 = arith.mulf %35, %39 : vector<2x16xf32>
    %c0_17 = arith.constant 0 : index
    %c0_18 = arith.constant 0 : index
    %c0_19 = arith.constant 0 : index
    %41 = vector.load %arg2[%c0_17, %c0_18, %c0_19] : memref<1x2x16xbf16, #tpu.memory_space<vmem>>, vector<1x2x16xbf16>
    %42 = vector.shape_cast %41 : vector<1x2x16xbf16> to vector<2x16xbf16>
    %c0_20 = arith.constant 0 : index
    %c0_21 = arith.constant 0 : index
    %43 = vector.load %arg13[%c0_20, %c0_21] : memref<2x16xf32, #tpu.memory_space<vmem>>, vector<2x16xf32>
    %c0_22 = arith.constant 0 : index
    %c0_23 = arith.constant 0 : index
    %44 = vector.load %arg14[%c0_22, %c0_23] : memref<2x16xf32, #tpu.memory_space<vmem>>, vector<2x16xf32>
    %c0_24 = arith.constant 0 : index
    %c0_25 = arith.constant 0 : index
    %45 = vector.load %arg6[%c0_24, %c0_25] : memref<16x64xbf16, #tpu.memory_space<vmem>>, vector<16x64xbf16>
    %cst_26 = arith.constant dense<0.000000e+00> : vector<2x64xf32>
    %46 = tpu.matmul %42, %45, %cst_26 {dimension_numbers = #tpu.dot_dimension_numbers<[1], [0], [0], [1], [0, 0, 1, 1], [], []>} : vector<2x16xbf16>, vector<16x64xbf16>, vector<2x64xf32> -> vector<2x64xf32>
    %47 = arith.truncf %43 : vector<2x16xf32> to vector<2x16xbf16>
    %c0_27 = arith.constant 0 : index
    %c0_28 = arith.constant 0 : index
    %48 = vector.load %arg7[%c0_27, %c0_28] : memref<16x64xbf16, #tpu.memory_space<vmem>>, vector<16x64xbf16>
    %cst_29 = arith.constant dense<0.000000e+00> : vector<2x64xf32>
    %49 = tpu.matmul %47, %48, %cst_29 {dimension_numbers = #tpu.dot_dimension_numbers<[1], [0], [0], [1], [0, 0, 1, 1], [], []>} : vector<2x16xbf16>, vector<16x64xbf16>, vector<2x64xf32> -> vector<2x64xf32>
    %50 = arith.addf %46, %49 : vector<2x64xf32>
    %c0_30 = arith.constant 0 : index
    %c0_31 = arith.constant 0 : index
    %51 = vector.load %arg8[%c0_30, %c0_31] : memref<1x64xf32, #tpu.memory_space<vmem>>, vector<1x64xf32>
    %52 = vector.broadcast %51 : vector<1x64xf32> to vector<2x64xf32>
    %53 = arith.addf %50, %52 : vector<2x64xf32>
    %54 = vector.extract_strided_slice %53 {offsets = [0, 0], sizes = [2, 16], strides = [1, 1]} : vector<2x64xf32> to vector<2x16xf32>
    %55 = arith.negf %54 : vector<2x16xf32>
    %56 = math.exp %55 : vector<2x16xf32>
    %cst_32 = arith.constant 1.000000e+00 : f32
    %57 = vector.broadcast %cst_32 : f32 to vector<2x16xf32>
    %58 = arith.addf %57, %56 : vector<2x16xf32>
    %59 = arith.divf %57, %58 : vector<2x16xf32>
    %60 = vector.extract_strided_slice %53 {offsets = [0, 16], sizes = [2, 16], strides = [1, 1]} : vector<2x64xf32> to vector<2x16xf32>
    %61 = arith.negf %60 : vector<2x16xf32>
    %62 = math.exp %61 : vector<2x16xf32>
    %cst_33 = arith.constant 1.000000e+00 : f32
    %63 = vector.broadcast %cst_33 : f32 to vector<2x16xf32>
    %64 = arith.addf %63, %62 : vector<2x16xf32>
    %65 = arith.divf %63, %64 : vector<2x16xf32>
    %66 = vector.extract_strided_slice %53 {offsets = [0, 32], sizes = [2, 16], strides = [1, 1]} : vector<2x64xf32> to vector<2x16xf32>
    %67 = math.tanh %66 : vector<2x16xf32>
    %68 = vector.extract_strided_slice %53 {offsets = [0, 48], sizes = [2, 16], strides = [1, 1]} : vector<2x64xf32> to vector<2x16xf32>
    %69 = arith.negf %68 : vector<2x16xf32>
    %70 = math.exp %69 : vector<2x16xf32>
    %cst_34 = arith.constant 1.000000e+00 : f32
    %71 = vector.broadcast %cst_34 : f32 to vector<2x16xf32>
    %72 = arith.addf %71, %70 : vector<2x16xf32>
    %73 = arith.divf %71, %72 : vector<2x16xf32>
    %74 = arith.mulf %65, %44 : vector<2x16xf32>
    %75 = arith.mulf %59, %67 : vector<2x16xf32>
    %76 = arith.addf %74, %75 : vector<2x16xf32>
    %77 = math.tanh %76 : vector<2x16xf32>
    %78 = arith.mulf %73, %77 : vector<2x16xf32>
    %c0_35 = arith.constant 0 : index
    %c0_36 = arith.constant 0 : index
    %79 = vector.load %arg11[%c0_35, %c0_36] : memref<2x16xf32, #tpu.memory_space<vmem>>, vector<2x16xf32>
    tpu.vector_store %arg11[%c0_35, %c0_36], %40 {strides = array<i32>} : memref<2x16xf32, #tpu.memory_space<vmem>>, vector<2x16xf32>,
    %c0_37 = arith.constant 0 : index
    %c0_38 = arith.constant 0 : index
    %80 = vector.load %arg12[%c0_37, %c0_38] : memref<2x16xf32, #tpu.memory_space<vmem>>, vector<2x16xf32>
    tpu.vector_store %arg12[%c0_37, %c0_38], %38 {strides = array<i32>} : memref<2x16xf32, #tpu.memory_space<vmem>>, vector<2x16xf32>,
    %c0_39 = arith.constant 0 : index
    %c0_40 = arith.constant 0 : index
    %81 = vector.load %arg13[%c0_39, %c0_40] : memref<2x16xf32, #tpu.memory_space<vmem>>, vector<2x16xf32>
    tpu.vector_store %arg13[%c0_39, %c0_40], %78 {strides = array<i32>} : memref<2x16xf32, #tpu.memory_space<vmem>>, vector<2x16xf32>,
    %c0_41 = arith.constant 0 : index
    %c0_42 = arith.constant 0 : index
    %82 = vector.load %arg14[%c0_41, %c0_42] : memref<2x16xf32, #tpu.memory_space<vmem>>, vector<2x16xf32>
    tpu.vector_store %arg14[%c0_41, %c0_42], %76 {strides = array<i32>} : memref<2x16xf32, #tpu.memory_space<vmem>>, vector<2x16xf32>,
    %83 = arith.truncf %40 : vector<2x16xf32> to vector<2x16xbf16>
    %c0_43 = arith.constant 0 : index
    %c0_44 = arith.constant 0 : index
    %c0_45 = arith.constant 0 : index
    %84 = vector.load %arg9[%c0_43, %c0_44, %c0_45] : memref<1x2x16xbf16, #tpu.memory_space<vmem>>, vector<1x2x16xbf16>
    %85 = vector.shape_cast %84 : vector<1x2x16xbf16> to vector<2x16xbf16>
    %86 = vector.shape_cast %83 : vector<2x16xbf16> to vector<1x2x16xbf16>
    tpu.vector_store %arg9[%c0_43, %c0_44, %c0_45], %86 {strides = array<i32>} : memref<1x2x16xbf16, #tpu.memory_space<vmem>>, vector<1x2x16xbf16>,
    %87 = arith.truncf %78 : vector<2x16xf32> to vector<2x16xbf16>
    %c0_46 = arith.constant 0 : index
    %c0_47 = arith.constant 0 : index
    %c0_48 = arith.constant 0 : index
    %88 = vector.load %arg10[%c0_46, %c0_47, %c0_48] : memref<1x2x16xbf16, #tpu.memory_space<vmem>>, vector<1x2x16xbf16>
    %89 = vector.shape_cast %88 : vector<1x2x16xbf16> to vector<2x16xbf16>
    %90 = vector.shape_cast %87 : vector<2x16xbf16> to vector<1x2x16xbf16>
    tpu.vector_store %arg10[%c0_46, %c0_47, %c0_48], %90 {strides = array<i32>} : memref<1x2x16xbf16, #tpu.memory_space<vmem>>, vector<1x2x16xbf16>,
    return
  }
  func.func @transform_0(%arg0: i32) -> (i32, i32, i32) {
    %c0_i32 = arith.constant 0 : i32
    %c0_i32_0 = arith.constant 0 : i32
    %c0_i32_1 = arith.constant 0 : i32
    return %arg0, %c0_i32, %c0_i32_0 : i32, i32, i32
  }
  func.func @transform_1(%arg0: i32) -> (i32, i32, i32) {
    %c7_i32 = arith.constant 7 : i32
    %0 = arith.subi %c7_i32, %arg0 : i32
    %c0_i32 = arith.constant 0 : i32
    %c0_i32_0 = arith.constant 0 : i32
    %c0_i32_1 = arith.constant 0 : i32
    return %0, %c0_i32, %c0_i32_0 : i32, i32, i32
  }
  func.func @transform_2(%arg0: i32) -> (i32, i32) {
    %c0_i32 = arith.constant 0 : i32
    %c0_i32_0 = arith.constant 0 : i32
    %c0_i32_1 = arith.constant 0 : i32
    return %c0_i32, %c0_i32_0 : i32, i32
  }
  func.func @transform_3(%arg0: i32) -> (i32, i32) {
    %c0_i32 = arith.constant 0 : i32
    %c0_i32_0 = arith.constant 0 : i32
    %c0_i32_1 = arith.constant 0 : i32
    return %c0_i32, %c0_i32_0 : i32, i32
  }
  func.func @transform_4(%arg0: i32) -> (i32, i32) {
    %c0_i32 = arith.constant 0 : i32
    %c0_i32_0 = arith.constant 0 : i32
    %c0_i32_1 = arith.constant 0 : i32
    return %c0_i32, %c0_i32_0 : i32, i32
  }
  func.func @transform_5(%arg0: i32) -> (i32, i32) {
    %c0_i32 = arith.constant 0 : i32
    %c0_i32_0 = arith.constant 0 : i32
    %c0_i32_1 = arith.constant 0 : i32
    return %c0_i32, %c0_i32_0 : i32, i32
  }
  func.func @transform_6(%arg0: i32) -> (i32, i32) {
    %c0_i32 = arith.constant 0 : i32
    %c0_i32_0 = arith.constant 0 : i32
    %c0_i32_1 = arith.constant 0 : i32
    return %c0_i32, %c0_i32_0 : i32, i32
  }
  func.func @transform_7(%arg0: i32) -> (i32, i32) {
    %c0_i32 = arith.constant 0 : i32
    %c0_i32_0 = arith.constant 0 : i32
    %c0_i32_1 = arith.constant 0 : i32
    return %c0_i32, %c0_i32_0 : i32, i32
  }
  func.func @transform_8(%arg0: i32) -> (i32, i32, i32) {
    %c0_i32 = arith.constant 0 : i32
    %c0_i32_0 = arith.constant 0 : i32
    %c0_i32_1 = arith.constant 0 : i32
    return %arg0, %c0_i32, %c0_i32_0 : i32, i32, i32
  }
  func.func @transform_9(%arg0: i32) -> (i32, i32, i32) {
    %c7_i32 = arith.constant 7 : i32
    %0 = arith.subi %c7_i32, %arg0 : i32
    %c0_i32 = arith.constant 0 : i32
    %c0_i32_0 = arith.constant 0 : i32
    %c0_i32_1 = arith.constant 0 : i32
    return %0, %c0_i32, %c0_i32_0 : i32, i32, i32
  }
  func.func @transform_10(%arg0: i32) -> (i32, i32) {
    %c0_i32 = arith.constant 0 : i32
    %c0_i32_0 = arith.constant 0 : i32
    %c0_i32_1 = arith.constant 0 : i32
    return %c0_i32, %c0_i32_0 : i32, i32
  }
  func.func @transform_11(%arg0: i32) -> (i32, i32) {
    %c0_i32 = arith.constant 0 : i32
    %c0_i32_0 = arith.constant 0 : i32
    %c0_i32_1 = arith.constant 0 : i32
    return %c0_i32, %c0_i32_0 : i32, i32
  }
  func.func @transform_12(%arg0: i32) -> (i32, i32) {
    %c0_i32 = arith.constant 0 : i32
    %c0_i32_0 = arith.constant 0 : i32
    %c0_i32_1 = arith.constant 0 : i32
    return %c0_i32, %c0_i32_0 : i32, i32
  }
  func.func @transform_13(%arg0: i32) -> (i32, i32) {
    %c0_i32 = arith.constant 0 : i32
    %c0_i32_0 = arith.constant 0 : i32
    %c0_i32_1 = arith.constant 0 : i32
    return %c0_i32, %c0_i32_0 : i32, i32
  }
}

module attributes {stable_mosaic.version = 11 : i64} {
  func.func @_decoder_kernel(%arg0: i32, %arg1: memref<2x16xbf16, #tpu.memory_space<vmem>>, %arg2: memref<2x32xf32, #tpu.memory_space<vmem>>, %arg3: memref<2x32xf32, #tpu.memory_space<vmem>>, %arg4: memref<2x8x32xbf16, #tpu.memory_space<vmem>>, %arg5: memref<28x16xbf16, #tpu.memory_space<vmem>>, %arg6: memref<16x128xbf16, #tpu.memory_space<vmem>>, %arg7: memref<32x128xbf16, #tpu.memory_space<vmem>>, %arg8: memref<1x128xf32, #tpu.memory_space<vmem>>, %arg9: memref<32x32xbf16, #tpu.memory_space<vmem>>, %arg10: memref<64x32xbf16, #tpu.memory_space<vmem>>, %arg11: memref<32x128xbf16, #tpu.memory_space<vmem>>, %arg12: memref<1x128xf32, #tpu.memory_space<vmem>>, %arg13: memref<1x2x128xf32, #tpu.memory_space<vmem>>, %arg14: memref<2x32xf32, #tpu.memory_space<vmem>>, %arg15: memref<2x32xf32, #tpu.memory_space<vmem>>, %arg16: memref<2x16xbf16, #tpu.memory_space<vmem>>) attributes {dimension_semantics = [#tpu.dimension_semantics<arbitrary>], iteration_bounds = array<i64: 6>, scalar_prefetch = 0 : i64, scratch_operands = 3 : i64, tpu.core_type = #tpu.core_type<tc>, window_params = [{pipeline_mode = #tpu.pipeline_mode<synchronous>, transform_indices = @transform_0, window_bounds = array<i64: 2, 16>}, {pipeline_mode = #tpu.pipeline_mode<synchronous>, transform_indices = @transform_1, window_bounds = array<i64: 2, 32>}, {pipeline_mode = #tpu.pipeline_mode<synchronous>, transform_indices = @transform_2, window_bounds = array<i64: 2, 32>}, {pipeline_mode = #tpu.pipeline_mode<synchronous>, transform_indices = @transform_3, window_bounds = array<i64: 2, 8, 32>}, {pipeline_mode = #tpu.pipeline_mode<synchronous>, transform_indices = @transform_4, window_bounds = array<i64: 28, 16>}, {pipeline_mode = #tpu.pipeline_mode<synchronous>, transform_indices = @transform_5, window_bounds = array<i64: 16, 128>}, {pipeline_mode = #tpu.pipeline_mode<synchronous>, transform_indices = @transform_6, window_bounds = array<i64: 32, 128>}, {pipeline_mode = #tpu.pipeline_mode<synchronous>, transform_indices = @transform_7, window_bounds = array<i64: 1, 128>}, {pipeline_mode = #tpu.pipeline_mode<synchronous>, transform_indices = @transform_8, window_bounds = array<i64: 32, 32>}, {pipeline_mode = #tpu.pipeline_mode<synchronous>, transform_indices = @transform_9, window_bounds = array<i64: 64, 32>}, {pipeline_mode = #tpu.pipeline_mode<synchronous>, transform_indices = @transform_10, window_bounds = array<i64: 32, 128>}, {pipeline_mode = #tpu.pipeline_mode<synchronous>, transform_indices = @transform_11, window_bounds = array<i64: 1, 128>}, {transform_indices = @transform_12, window_bounds = array<i64: 1, 2, 128>}]} {
    %c0_i32 = arith.constant 0 : i32
    %0 = arith.cmpi eq, %arg0, %c0_i32 : i32
    %1 = arith.extui %0 : i1 to i32
    %c0_i32_0 = arith.constant 0 : i32
    %2 = arith.cmpi ne, %1, %c0_i32_0 : i32
    scf.if %2 {
      %c0_49 = arith.constant 0 : index
      %c0_50 = arith.constant 0 : index
      %98 = vector.load %arg2[%c0_49, %c0_50] : memref<2x32xf32, #tpu.memory_space<vmem>>, vector<2x32xf32>
      %c0_51 = arith.constant 0 : index
      %c0_52 = arith.constant 0 : index
      %99 = vector.load %arg14[%c0_51, %c0_52] : memref<2x32xf32, #tpu.memory_space<vmem>>, vector<2x32xf32>
      tpu.vector_store %arg14[%c0_51, %c0_52], %98 {strides = array<i32>} : memref<2x32xf32, #tpu.memory_space<vmem>>, vector<2x32xf32>,
      %c0_53 = arith.constant 0 : index
      %c0_54 = arith.constant 0 : index
      %100 = vector.load %arg3[%c0_53, %c0_54] : memref<2x32xf32, #tpu.memory_space<vmem>>, vector<2x32xf32>
      %c0_55 = arith.constant 0 : index
      %c0_56 = arith.constant 0 : index
      %101 = vector.load %arg15[%c0_55, %c0_56] : memref<2x32xf32, #tpu.memory_space<vmem>>, vector<2x32xf32>
      tpu.vector_store %arg15[%c0_55, %c0_56], %100 {strides = array<i32>} : memref<2x32xf32, #tpu.memory_space<vmem>>, vector<2x32xf32>,
      %c0_57 = arith.constant 0 : index
      %c0_58 = arith.constant 0 : index
      %102 = vector.load %arg1[%c0_57, %c0_58] : memref<2x16xbf16, #tpu.memory_space<vmem>>, vector<2x16xbf16>
      %c0_59 = arith.constant 0 : index
      %c0_60 = arith.constant 0 : index
      %103 = vector.load %arg16[%c0_59, %c0_60] : memref<2x16xbf16, #tpu.memory_space<vmem>>, vector<2x16xbf16>
      tpu.vector_store %arg16[%c0_59, %c0_60], %102 {strides = array<i32>} : memref<2x16xbf16, #tpu.memory_space<vmem>>, vector<2x16xbf16>,
    } else {
    }
    %c0 = arith.constant 0 : index
    %c0_1 = arith.constant 0 : index
    %3 = vector.load %arg16[%c0, %c0_1] : memref<2x16xbf16, #tpu.memory_space<vmem>>, vector<2x16xbf16>
    %c0_2 = arith.constant 0 : index
    %c0_3 = arith.constant 0 : index
    %4 = vector.load %arg14[%c0_2, %c0_3] : memref<2x32xf32, #tpu.memory_space<vmem>>, vector<2x32xf32>
    %c0_4 = arith.constant 0 : index
    %c0_5 = arith.constant 0 : index
    %5 = vector.load %arg15[%c0_4, %c0_5] : memref<2x32xf32, #tpu.memory_space<vmem>>, vector<2x32xf32>
    %c0_6 = arith.constant 0 : index
    %c0_7 = arith.constant 0 : index
    %6 = vector.load %arg6[%c0_6, %c0_7] : memref<16x128xbf16, #tpu.memory_space<vmem>>, vector<16x128xbf16>
    %cst = arith.constant dense<0.000000e+00> : vector<2x128xf32>
    %7 = tpu.matmul %3, %6, %cst {dimension_numbers = #tpu.dot_dimension_numbers<[1], [0], [0], [1], [0, 0, 1, 1], [], []>} : vector<2x16xbf16>, vector<16x128xbf16>, vector<2x128xf32> -> vector<2x128xf32>
    %8 = arith.truncf %4 : vector<2x32xf32> to vector<2x32xbf16>
    %c0_8 = arith.constant 0 : index
    %c0_9 = arith.constant 0 : index
    %9 = vector.load %arg7[%c0_8, %c0_9] : memref<32x128xbf16, #tpu.memory_space<vmem>>, vector<32x128xbf16>
    %cst_10 = arith.constant dense<0.000000e+00> : vector<2x128xf32>
    %10 = tpu.matmul %8, %9, %cst_10 {dimension_numbers = #tpu.dot_dimension_numbers<[1], [0], [0], [1], [0, 0, 1, 1], [], []>} : vector<2x32xbf16>, vector<32x128xbf16>, vector<2x128xf32> -> vector<2x128xf32>
    %11 = arith.addf %7, %10 : vector<2x128xf32>
    %c0_11 = arith.constant 0 : index
    %c0_12 = arith.constant 0 : index
    %12 = vector.load %arg8[%c0_11, %c0_12] : memref<1x128xf32, #tpu.memory_space<vmem>>, vector<1x128xf32>
    %13 = vector.broadcast %12 : vector<1x128xf32> to vector<2x128xf32>
    %14 = arith.addf %11, %13 : vector<2x128xf32>
    %15 = vector.extract_strided_slice %14 {offsets = [0, 0], sizes = [2, 32], strides = [1, 1]} : vector<2x128xf32> to vector<2x32xf32>
    %16 = arith.negf %15 : vector<2x32xf32>
    %17 = math.exp %16 : vector<2x32xf32>
    %cst_13 = arith.constant 1.000000e+00 : f32
    %18 = vector.broadcast %cst_13 : f32 to vector<2x32xf32>
    %19 = arith.addf %18, %17 : vector<2x32xf32>
    %20 = arith.divf %18, %19 : vector<2x32xf32>
    %21 = vector.extract_strided_slice %14 {offsets = [0, 32], sizes = [2, 32], strides = [1, 1]} : vector<2x128xf32> to vector<2x32xf32>
    %22 = arith.negf %21 : vector<2x32xf32>
    %23 = math.exp %22 : vector<2x32xf32>
    %cst_14 = arith.constant 1.000000e+00 : f32
    %24 = vector.broadcast %cst_14 : f32 to vector<2x32xf32>
    %25 = arith.addf %24, %23 : vector<2x32xf32>
    %26 = arith.divf %24, %25 : vector<2x32xf32>
    %27 = vector.extract_strided_slice %14 {offsets = [0, 64], sizes = [2, 32], strides = [1, 1]} : vector<2x128xf32> to vector<2x32xf32>
    %28 = math.tanh %27 : vector<2x32xf32>
    %29 = vector.extract_strided_slice %14 {offsets = [0, 96], sizes = [2, 32], strides = [1, 1]} : vector<2x128xf32> to vector<2x32xf32>
    %30 = arith.negf %29 : vector<2x32xf32>
    %31 = math.exp %30 : vector<2x32xf32>
    %cst_15 = arith.constant 1.000000e+00 : f32
    %32 = vector.broadcast %cst_15 : f32 to vector<2x32xf32>
    %33 = arith.addf %32, %31 : vector<2x32xf32>
    %34 = arith.divf %32, %33 : vector<2x32xf32>
    %35 = arith.mulf %26, %5 : vector<2x32xf32>
    %36 = arith.mulf %20, %28 : vector<2x32xf32>
    %37 = arith.addf %35, %36 : vector<2x32xf32>
    %38 = math.tanh %37 : vector<2x32xf32>
    %39 = arith.mulf %34, %38 : vector<2x32xf32>
    %c0_16 = arith.constant 0 : index
    %c0_17 = arith.constant 0 : index
    %40 = vector.load %arg14[%c0_16, %c0_17] : memref<2x32xf32, #tpu.memory_space<vmem>>, vector<2x32xf32>
    tpu.vector_store %arg14[%c0_16, %c0_17], %39 {strides = array<i32>} : memref<2x32xf32, #tpu.memory_space<vmem>>, vector<2x32xf32>,
    %c0_18 = arith.constant 0 : index
    %c0_19 = arith.constant 0 : index
    %41 = vector.load %arg15[%c0_18, %c0_19] : memref<2x32xf32, #tpu.memory_space<vmem>>, vector<2x32xf32>
    tpu.vector_store %arg15[%c0_18, %c0_19], %37 {strides = array<i32>} : memref<2x32xf32, #tpu.memory_space<vmem>>, vector<2x32xf32>,
    %42 = arith.truncf %39 : vector<2x32xf32> to vector<2x32xbf16>
    %c0_20 = arith.constant 0 : index
    %c0_21 = arith.constant 0 : index
    %c0_22 = arith.constant 0 : index
    %43 = vector.load %arg4[%c0_20, %c0_21, %c0_22] : memref<2x8x32xbf16, #tpu.memory_space<vmem>>, vector<2x8x32xbf16>
    %c0_23 = arith.constant 0 : index
    %c0_24 = arith.constant 0 : index
    %44 = vector.load %arg9[%c0_23, %c0_24] : memref<32x32xbf16, #tpu.memory_space<vmem>>, vector<32x32xbf16>
    %cst_25 = arith.constant dense<0.000000e+00> : vector<2x32xf32>
    %45 = tpu.matmul %42, %44, %cst_25 {dimension_numbers = #tpu.dot_dimension_numbers<[1], [0], [0], [1], [0, 0, 1, 1], [], []>} : vector<2x32xbf16>, vector<32x32xbf16>, vector<2x32xf32> -> vector<2x32xf32>
    %46 = arith.truncf %45 : vector<2x32xf32> to vector<2x32xbf16>
    %47 = vector.shape_cast %46 : vector<2x32xbf16> to vector<2x1x32xbf16>
    "tpu.trace_start"() <{level = 10 : i32, message = "bqh,bsh->bqs"}> : () -> ()
    %cst_26 = arith.constant dense<0.000000e+00> : vector<2x1x8xf32>
    %48 = tpu.matmul %47, %43, %cst_26 {dimension_numbers = #tpu.dot_dimension_numbers<[2], [2], [1], [1], [0, 0, 0, 1, 1, 1], [0], [0]>} : vector<2x1x32xbf16>, vector<2x8x32xbf16>, vector<2x1x8xf32> -> vector<2x1x8xf32>
    "tpu.trace_stop"() : () -> ()
    %cst_27 = arith.constant dense<0xFF800000> : vector<2x1xf32>
    %49 = vector.multi_reduction <maximumf>, %48, %cst_27 [2] : vector<2x1x8xf32> to vector<2x1xf32>
    %50 = vector.shape_cast %49 : vector<2x1xf32> to vector<2x1x1xf32>
    %51 = vector.broadcast %50 : vector<2x1x1xf32> to vector<2x1x8xf32>
    %52 = arith.subf %48, %51 : vector<2x1x8xf32>
    %53 = math.exp %52 : vector<2x1x8xf32>
    %cst_28 = arith.constant dense<0.000000e+00> : vector<2x1xf32>
    %54 = vector.multi_reduction <add>, %53, %cst_28 [2] : vector<2x1x8xf32> to vector<2x1xf32>
    %55 = vector.shape_cast %54 : vector<2x1xf32> to vector<2x1x1xf32>
    %56 = tpu.reciprocal %55 {approx = true} : vector<2x1x1xf32> -> vector<2x1x1xf32>
    %57 = vector.broadcast %56 : vector<2x1x1xf32> to vector<2x1x8xf32>
    %58 = arith.mulf %53, %57 : vector<2x1x8xf32>
    %59 = arith.truncf %58 : vector<2x1x8xf32> to vector<2x1x8xbf16>
    "tpu.trace_start"() <{level = 10 : i32, message = "bqs,bsh->bqh"}> : () -> ()
    %cst_29 = arith.constant dense<0.000000e+00> : vector<2x1x32xf32>
    %60 = tpu.matmul %59, %43, %cst_29 {dimension_numbers = #tpu.dot_dimension_numbers<[2], [1], [1], [2], [0, 0, 0, 1, 1, 2], [0], [0]>} : vector<2x1x8xbf16>, vector<2x8x32xbf16>, vector<2x1x32xf32> -> vector<2x1x32xf32>
    "tpu.trace_stop"() : () -> ()
    %61 = vector.shape_cast %60 : vector<2x1x32xf32> to vector<2x32xf32>
    %c0_30 = arith.constant 0 : index
    %c0_31 = arith.constant 0 : index
    %62 = vector.load %arg10[%c0_30, %c0_31] : memref<64x32xbf16, #tpu.memory_space<vmem>>, vector<64x32xbf16>
    %63 = arith.truncf %61 : vector<2x32xf32> to vector<2x32xbf16>
    %64 = vector.extract_strided_slice %62 {offsets = [0, 0], sizes = [32, 32], strides = [1, 1]} : vector<64x32xbf16> to vector<32x32xbf16>
    %cst_32 = arith.constant dense<0.000000e+00> : vector<2x32xf32>
    %65 = tpu.matmul %63, %64, %cst_32 {dimension_numbers = #tpu.dot_dimension_numbers<[1], [0], [0], [1], [0, 0, 1, 1], [], []>} : vector<2x32xbf16>, vector<32x32xbf16>, vector<2x32xf32> -> vector<2x32xf32>
    %66 = vector.extract_strided_slice %62 {offsets = [32, 0], sizes = [32, 32], strides = [1, 1]} : vector<64x32xbf16> to vector<32x32xbf16>
    %cst_33 = arith.constant dense<0.000000e+00> : vector<2x32xf32>
    %67 = tpu.matmul %42, %66, %cst_33 {dimension_numbers = #tpu.dot_dimension_numbers<[1], [0], [0], [1], [0, 0, 1, 1], [], []>} : vector<2x32xbf16>, vector<32x32xbf16>, vector<2x32xf32> -> vector<2x32xf32>
    %68 = arith.addf %65, %67 : vector<2x32xf32>
    %69 = math.tanh %68 : vector<2x32xf32>
    %70 = arith.truncf %69 : vector<2x32xf32> to vector<2x32xbf16>
    %c0_34 = arith.constant 0 : index
    %c0_35 = arith.constant 0 : index
    %71 = vector.load %arg11[%c0_34, %c0_35] : memref<32x128xbf16, #tpu.memory_space<vmem>>, vector<32x128xbf16>
    %cst_36 = arith.constant dense<0.000000e+00> : vector<2x128xf32>
    %72 = tpu.matmul %70, %71, %cst_36 {dimension_numbers = #tpu.dot_dimension_numbers<[1], [0], [0], [1], [0, 0, 1, 1], [], []>} : vector<2x32xbf16>, vector<32x128xbf16>, vector<2x128xf32> -> vector<2x128xf32>
    %c0_37 = arith.constant 0 : index
    %c0_38 = arith.constant 0 : index
    %73 = vector.load %arg12[%c0_37, %c0_38] : memref<1x128xf32, #tpu.memory_space<vmem>>, vector<1x128xf32>
    %74 = vector.broadcast %73 : vector<1x128xf32> to vector<2x128xf32>
    %75 = arith.addf %72, %74 : vector<2x128xf32>
    %c0_39 = arith.constant 0 : index
    %c0_40 = arith.constant 0 : index
    %c0_41 = arith.constant 0 : index
    %76 = vector.load %arg13[%c0_39, %c0_40, %c0_41] : memref<1x2x128xf32, #tpu.memory_space<vmem>>, vector<1x2x128xf32>
    %77 = vector.shape_cast %76 : vector<1x2x128xf32> to vector<2x128xf32>
    %78 = vector.shape_cast %75 : vector<2x128xf32> to vector<1x2x128xf32>
    tpu.vector_store %arg13[%c0_39, %c0_40, %c0_41], %78 {strides = array<i32>} : memref<1x2x128xf32, #tpu.memory_space<vmem>>, vector<1x2x128xf32>,
    %79 = tpu.iota {dimensions = array<i32: 1>} : vector<2x128xi32>
    %cst_42 = arith.constant dense<0xFF800000> : vector<2xf32>
    %80 = vector.multi_reduction <maximumf>, %75, %cst_42 [1] : vector<2x128xf32> to vector<2xf32>
    %81 = vector.shape_cast %80 : vector<2xf32> to vector<2x1xf32>
    %82 = vector.broadcast %81 : vector<2x1xf32> to vector<2x128xf32>
    %83 = arith.cmpf oeq, %75, %82 : vector<2x128xf32>
    %c128_i32 = arith.constant 128 : i32
    %84 = vector.broadcast %c128_i32 : i32 to vector<2x128xi32>
    %85 = arith.select %83, %79, %84 : vector<2x128xi1>, vector<2x128xi32>
    %cst_43 = arith.constant dense<2147483647> : vector<2xi32>
    %86 = vector.multi_reduction <minsi>, %85, %cst_43 [1] : vector<2x128xi32> to vector<2xi32>
    %87 = vector.shape_cast %86 : vector<2xi32> to vector<2x1xi32>
    %88 = tpu.iota {dimensions = array<i32: 1>} : vector<2x28xi32>
    %89 = vector.broadcast %87 : vector<2x1xi32> to vector<2x28xi32>
    %90 = arith.cmpi eq, %88, %89 : vector<2x28xi32>
    %91 = arith.extui %90 : vector<2x28xi1> to vector<2x28xi32>
    %92 = arith.sitofp %91 : vector<2x28xi32> to vector<2x28xf32>
    %93 = arith.truncf %92 : vector<2x28xf32> to vector<2x28xbf16>
    %c0_44 = arith.constant 0 : index
    %c0_45 = arith.constant 0 : index
    %94 = vector.load %arg5[%c0_44, %c0_45] : memref<28x16xbf16, #tpu.memory_space<vmem>>, vector<28x16xbf16>
    %cst_46 = arith.constant dense<0.000000e+00> : vector<2x16xf32>
    %95 = tpu.matmul %93, %94, %cst_46 {dimension_numbers = #tpu.dot_dimension_numbers<[1], [0], [0], [1], [0, 0, 1, 1], [], []>} : vector<2x28xbf16>, vector<28x16xbf16>, vector<2x16xf32> -> vector<2x16xf32>
    %96 = arith.truncf %95 : vector<2x16xf32> to vector<2x16xbf16>
    %c0_47 = arith.constant 0 : index
    %c0_48 = arith.constant 0 : index
    %97 = vector.load %arg16[%c0_47, %c0_48] : memref<2x16xbf16, #tpu.memory_space<vmem>>, vector<2x16xbf16>
    tpu.vector_store %arg16[%c0_47, %c0_48], %96 {strides = array<i32>} : memref<2x16xbf16, #tpu.memory_space<vmem>>, vector<2x16xbf16>,
    return
  }
  func.func @transform_0(%arg0: i32) -> (i32, i32) {
    %c0_i32 = arith.constant 0 : i32
    %c0_i32_0 = arith.constant 0 : i32
    %c0_i32_1 = arith.constant 0 : i32
    return %c0_i32, %c0_i32_0 : i32, i32
  }
  func.func @transform_1(%arg0: i32) -> (i32, i32) {
    %c0_i32 = arith.constant 0 : i32
    %c0_i32_0 = arith.constant 0 : i32
    %c0_i32_1 = arith.constant 0 : i32
    return %c0_i32, %c0_i32_0 : i32, i32
  }
  func.func @transform_2(%arg0: i32) -> (i32, i32) {
    %c0_i32 = arith.constant 0 : i32
    %c0_i32_0 = arith.constant 0 : i32
    %c0_i32_1 = arith.constant 0 : i32
    return %c0_i32, %c0_i32_0 : i32, i32
  }
  func.func @transform_3(%arg0: i32) -> (i32, i32, i32) {
    %c0_i32 = arith.constant 0 : i32
    %c0_i32_0 = arith.constant 0 : i32
    %c0_i32_1 = arith.constant 0 : i32
    %c0_i32_2 = arith.constant 0 : i32
    return %c0_i32, %c0_i32_0, %c0_i32_1 : i32, i32, i32
  }
  func.func @transform_4(%arg0: i32) -> (i32, i32) {
    %c0_i32 = arith.constant 0 : i32
    %c0_i32_0 = arith.constant 0 : i32
    %c0_i32_1 = arith.constant 0 : i32
    return %c0_i32, %c0_i32_0 : i32, i32
  }
  func.func @transform_5(%arg0: i32) -> (i32, i32) {
    %c0_i32 = arith.constant 0 : i32
    %c0_i32_0 = arith.constant 0 : i32
    %c0_i32_1 = arith.constant 0 : i32
    return %c0_i32, %c0_i32_0 : i32, i32
  }
  func.func @transform_6(%arg0: i32) -> (i32, i32) {
    %c0_i32 = arith.constant 0 : i32
    %c0_i32_0 = arith.constant 0 : i32
    %c0_i32_1 = arith.constant 0 : i32
    return %c0_i32, %c0_i32_0 : i32, i32
  }
  func.func @transform_7(%arg0: i32) -> (i32, i32) {
    %c0_i32 = arith.constant 0 : i32
    %c0_i32_0 = arith.constant 0 : i32
    %c0_i32_1 = arith.constant 0 : i32
    return %c0_i32, %c0_i32_0 : i32, i32
  }
  func.func @transform_8(%arg0: i32) -> (i32, i32) {
    %c0_i32 = arith.constant 0 : i32
    %c0_i32_0 = arith.constant 0 : i32
    %c0_i32_1 = arith.constant 0 : i32
    return %c0_i32, %c0_i32_0 : i32, i32
  }
  func.func @transform_9(%arg0: i32) -> (i32, i32) {
    %c0_i32 = arith.constant 0 : i32
    %c0_i32_0 = arith.constant 0 : i32
    %c0_i32_1 = arith.constant 0 : i32
    return %c0_i32, %c0_i32_0 : i32, i32
  }
  func.func @transform_10(%arg0: i32) -> (i32, i32) {
    %c0_i32 = arith.constant 0 : i32
    %c0_i32_0 = arith.constant 0 : i32
    %c0_i32_1 = arith.constant 0 : i32
    return %c0_i32, %c0_i32_0 : i32, i32
  }
  func.func @transform_11(%arg0: i32) -> (i32, i32) {
    %c0_i32 = arith.constant 0 : i32
    %c0_i32_0 = arith.constant 0 : i32
    %c0_i32_1 = arith.constant 0 : i32
    return %c0_i32, %c0_i32_0 : i32, i32
  }
  func.func @transform_12(%arg0: i32) -> (i32, i32, i32) {
    %c0_i32 = arith.constant 0 : i32
    %c0_i32_0 = arith.constant 0 : i32
    %c0_i32_1 = arith.constant 0 : i32
    return %arg0, %c0_i32, %c0_i32_0 : i32, i32, i32
  }
}

</mosaic_0001>

<llo_original>
// kernel: _lambda_.2
$region0: #{_lambda_.2}
  #allocation0 [shape = 'u32[]', space=smem, size = 0x4, offset = 0x4, fixed_abs, tag = 'smem constant byte address 0x4 - core index']
  #allocation1 [shape = 'u32[72,128]{1,0:T(1,128)}', space=vmem, size = 0x9000, scoped, tag = 'internal scratch']
  %s0 = inlined_call_operand.vmem [shape: bf16[8,2,16], index: 0, kind: input, shape index: {}, may-alias: {0,1}]
  %s1 = inlined_call_operand.vmem [shape: bf16[8,2,16], index: 1, kind: input, shape index: {}, may-alias: {0,1}]
  %s2 = inlined_call_operand.vmem [shape: bf16[16,64], index: 2, kind: input, shape index: {}]
  %s3 = inlined_call_operand.vmem [shape: bf16[16,64], index: 3, kind: input, shape index: {}]
  %s4 = inlined_call_operand.vmem [shape: f32[1,64], index: 4, kind: input, shape index: {}]
  %s5 = inlined_call_operand.vmem [shape: bf16[16,64], index: 5, kind: input, shape index: {}]
  %s6 = inlined_call_operand.vmem [shape: bf16[16,64], index: 6, kind: input, shape index: {}]
  %s7 = inlined_call_operand.vmem [shape: f32[1,64], index: 7, kind: input, shape index: {}]
  %s8 = inlined_call_operand.vmem [shape: bf16[8,2,16], index: 8, kind: output, shape index: {0}]
  %s9 = inlined_call_operand.vmem [shape: bf16[8,2,16], index: 9, kind: output, shape index: {1}]
  %s10 = inlined_call_operand.vmem [shape: f32[2,16], index: 10, kind: output, shape index: {2}]
  %s11 = inlined_call_operand.vmem [shape: f32[2,16], index: 11, kind: output, shape index: {3}]
  %s12 = inlined_call_operand.vmem [shape: f32[2,16], index: 12, kind: output, shape index: {4}]
  %s13 = inlined_call_operand.vmem [shape: f32[2,16], index: 13, kind: output, shape index: {5}]
  %14 = xla_tuple %s8, %s9, %s10, %s11, %s12, %s13
  %s15 = sld [smem:[#allocation0]]
  $region109: #{_lambda_.2} parent=0
    _
  %s17 = ssub.s32 1, %s15
  %s18 = scalar_select 0, %s17, %s15
  loop: start=0, step=1, limit=10
  $region2: #{_lambda_.2} parent=0 // loop_pre_header
    _
  $region3: #{_lambda_.2} parent=0 // loop_header
    %s20 = sphi 0, %s24
    %p21 = scmp.ge.s32.totalorder %s20, 10
    %s30 = sphi 0, %s32
    %s33 = sphi 0, %s30
    %s34 = sphi 0, %s33
    %s50 = sphi 0, %s34
    %s58 = sphi 0, %s60
    %s61 = sphi 0, %s58
    %s62 = sphi 0, %s61
    %s78 = sphi 0, %s62
    %s82 = sphi 0, %s82
    %s84 = sphi 0, %s82
    %s85 = sphi 0, %s84
    %s99 = sphi 0, %s85
    %s103 = sphi 0, %s103
    %s105 = sphi 0, %s103
    %s106 = sphi 0, %s105
    %s120 = sphi 0, %s106
    %s124 = sphi 0, %s124
    %s126 = sphi 0, %s124
    %s127 = sphi 0, %s126
    %s141 = sphi 0, %s127
    %s145 = sphi 0, %s145
    %s147 = sphi 0, %s145
    %s148 = sphi 0, %s147
    %s162 = sphi 0, %s148
    %s166 = sphi 0, %s166
    %s168 = sphi 0, %s166
    %s169 = sphi 0, %s168
    %s183 = sphi 0, %s169
    %s187 = sphi 0, %s187
    %s189 = sphi 0, %s187
    %s190 = sphi 0, %s189
    %s204 = sphi 0, %s190
    %s210 = sphi 0, %s212
    %s213 = sphi 0, %s210
    %s214 = sphi 0, %s213
    %s230 = sphi 0, %s214
    %s238 = sphi 0, %s240
    %s241 = sphi 0, %s238
    %s242 = sphi 0, %s241
    %s258 = sphi 0, %s242
    %s262 = sphi 0, %s262
    %s264 = sphi 0, %s262
    %s265 = sphi 0, %s264
    %s279 = sphi 0, %s265
    %s283 = sphi 0, %s283
    %s285 = sphi 0, %s283
    %s286 = sphi 0, %s285
    %s300 = sphi 0, %s286
    %s304 = sphi 0, %s304
    %s306 = sphi 0, %s304
    %s307 = sphi 0, %s306
    %s321 = sphi 0, %s307
    %s325 = sphi 0, %s325
    %s327 = sphi 0, %s325
    %s328 = sphi 0, %s327
    %s342 = sphi 0, %s328
  $region4: #{_lambda_.2} parent=0 // loop_header_branch
    %23 = sbr.rel (%p21) target = $region8
  $region5: #{_lambda_.2} parent=0 // loop_body
    %s25 = ssub.s32 %s20, 1
    %s26 = ssub.s32 %s20, 2
    %s27 = sadd.s32 %s20, 1
    %s28 = ssub.s32 %s20, %s27
    %p29 = scmp.eq.s32.totalorder %s28, 0
    %s31 = sadd.s32 %s30, 1
    %s32 = scalar_select %p29, %s30, %s31
    %p35 = pneg %p29
    %p36 = scmp.eq.s32.totalorder %s20, 7
    %p37 = por %p35, %p36
    %p38 = scmp.ne.s32.totalorder %s30, %s33
    %p39 = scmp.eq.s32.totalorder %s20, 0
    %p40 = por %p38, %p39
    %p41 = scmp.ne.s32.totalorder %s30, %s33
    %p42 = scmp.eq.s32.totalorder %s25, 7
    %p43 = por %p41, %p42
    %p44 = scmp.ne.s32.totalorder %s33, %s34
    %p45 = scmp.eq.s32.totalorder %s25, 0
    %p46 = por %p44, %p45
    %p47 = scmp.ne.s32.totalorder %s33, %s34
    %p48 = scmp.eq.s32.totalorder %s26, 7
    %p49 = por %p47, %p48
    %p51 = scmp.ne.s32.totalorder %s34, %s50
    %p52 = scmp.eq.s32.totalorder %s26, 0
    %p53 = por %p51, %p52
    %s54 = ssub.s32 7, %s20
    %s55 = ssub.s32 7, %s27
    %s56 = ssub.s32 %s54, %s55
    %p57 = scmp.eq.s32.totalorder %s56, 0
    %s59 = sadd.s32 %s58, 1
    %s60 = scalar_select %p57, %s58, %s59
    %p63 = pneg %p57
    %p64 = scmp.eq.s32.totalorder %s20, 7
    %p65 = por %p63, %p64
    %p66 = scmp.ne.s32.totalorder %s58, %s61
    %p67 = scmp.eq.s32.totalorder %s20, 0
    %p68 = por %p66, %p67
    %p69 = scmp.ne.s32.totalorder %s58, %s61
    %p70 = scmp.eq.s32.totalorder %s25, 7
    %p71 = por %p69, %p70
    %p72 = scmp.ne.s32.totalorder %s61, %s62
    %p73 = scmp.eq.s32.totalorder %s25, 0
    %p74 = por %p72, %p73
    %p75 = scmp.ne.s32.totalorder %s61, %s62
    %p76 = scmp.eq.s32.totalorder %s26, 7
    %p77 = por %p75, %p76
    %p79 = scmp.ne.s32.totalorder %s62, %s78
    %p80 = scmp.eq.s32.totalorder %s26, 0
    %p81 = por %p79, %p80
    %s83 = sadd.s32 %s82, 1
    %p86 = scmp.eq.s32.totalorder %s20, 7
    %p87 = scmp.ne.s32.totalorder %s82, %s84
    %p88 = scmp.eq.s32.totalorder %s20, 0
    %p89 = por %p87, %p88
    %p90 = scmp.ne.s32.totalorder %s82, %s84
    %p91 = scmp.eq.s32.totalorder %s25, 7
    %p92 = por %p90, %p91
    %p93 = scmp.ne.s32.totalorder %s84, %s85
    %p94 = scmp.eq.s32.totalorder %s25, 0
    %p95 = por %p93, %p94
    %p96 = scmp.ne.s32.totalorder %s84, %s85
    %p97 = scmp.eq.s32.totalorder %s26, 7
    %p98 = por %p96, %p97
    %p100 = scmp.ne.s32.totalorder %s85, %s99
    %p101 = scmp.eq.s32.totalorder %s26, 0
    %p102 = por %p100, %p101
    %s104 = sadd.s32 %s103, 1
    %p107 = scmp.eq.s32.totalorder %s20, 7
    %p108 = scmp.ne.s32.totalorder %s103, %s105
    %p109 = scmp.eq.s32.totalorder %s20, 0
    %p110 = por %p108, %p109
    %p111 = scmp.ne.s32.totalorder %s103, %s105
    %p112 = scmp.eq.s32.totalorder %s25, 7
    %p113 = por %p111, %p112
    %p114 = scmp.ne.s32.totalorder %s105, %s106
    %p115 = scmp.eq.s32.totalorder %s25, 0
    %p116 = por %p114, %p115
    %p117 = scmp.ne.s32.totalorder %s105, %s106
    %p118 = scmp.eq.s32.totalorder %s26, 7
    %p119 = por %p117, %p118
    %p121 = scmp.ne.s32.totalorder %s106, %s120
    %p122 = scmp.eq.s32.totalorder %s26, 0
    %p123 = por %p121, %p122
    %s125 = sadd.s32 %s124, 1
    %p128 = scmp.eq.s32.totalorder %s20, 7
    %p129 = scmp.ne.s32.totalorder %s124, %s126
    %p130 = scmp.eq.s32.totalorder %s20, 0
    %p131 = por %p129, %p130
    %p132 = scmp.ne.s32.totalorder %s124, %s126
    %p133 = scmp.eq.s32.totalorder %s25, 7
    %p134 = por %p132, %p133
    %p135 = scmp.ne.s32.totalorder %s126, %s127
    %p136 = scmp.eq.s32.totalorder %s25, 0
    %p137 = por %p135, %p136
    %p138 = scmp.ne.s32.totalorder %s126, %s127
    %p139 = scmp.eq.s32.totalorder %s26, 7
    %p140 = por %p138, %p139
    %p142 = scmp.ne.s32.totalorder %s127, %s141
    %p143 = scmp.eq.s32.totalorder %s26, 0
    %p144 = por %p142, %p143
    %s146 = sadd.s32 %s145, 1
    %p149 = scmp.eq.s32.totalorder %s20, 7
    %p150 = scmp.ne.s32.totalorder %s145, %s147
    %p151 = scmp.eq.s32.totalorder %s20, 0
    %p152 = por %p150, %p151
    %p153 = scmp.ne.s32.totalorder %s145, %s147
    %p154 = scmp.eq.s32.totalorder %s25, 7
    %p155 = por %p153, %p154
    %p156 = scmp.ne.s32.totalorder %s147, %s148
    %p157 = scmp.eq.s32.totalorder %s25, 0
    %p158 = por %p156, %p157
    %p159 = scmp.ne.s32.totalorder %s147, %s148
    %p160 = scmp.eq.s32.totalorder %s26, 7
    %p161 = por %p159, %p160
    %p163 = scmp.ne.s32.totalorder %s148, %s162
    %p164 = scmp.eq.s32.totalorder %s26, 0
    %p165 = por %p163, %p164
    %s167 = sadd.s32 %s166, 1
    %p170 = scmp.eq.s32.totalorder %s20, 7
    %p171 = scmp.ne.s32.totalorder %s166, %s168
    %p172 = scmp.eq.s32.totalorder %s20, 0
    %p173 = por %p171, %p172
    %p174 = scmp.ne.s32.totalorder %s166, %s168
    %p175 = scmp.eq.s32.totalorder %s25, 7
    %p176 = por %p174, %p175
    %p177 = scmp.ne.s32.totalorder %s168, %s169
    %p178 = scmp.eq.s32.totalorder %s25, 0
    %p179 = por %p177, %p178
    %p180 = scmp.ne.s32.totalorder %s168, %s169
    %p181 = scmp.eq.s32.totalorder %s26, 7
    %p182 = por %p180, %p181
    %p184 = scmp.ne.s32.totalorder %s169, %s183
    %p185 = scmp.eq.s32.totalorder %s26, 0
    %p186 = por %p184, %p185
    %s188 = sadd.s32 %s187, 1
    %p191 = scmp.eq.s32.totalorder %s20, 7
    %p192 = scmp.ne.s32.totalorder %s187, %s189
    %p193 = scmp.eq.s32.totalorder %s20, 0
    %p194 = por %p192, %p193
    %p195 = scmp.ne.s32.totalorder %s187, %s189
    %p196 = scmp.eq.s32.totalorder %s25, 7
    %p197 = por %p195, %p196
    %p198 = scmp.ne.s32.totalorder %s189, %s190
    %p199 = scmp.eq.s32.totalorder %s25, 0
    %p200 = por %p198, %p199
    %p201 = scmp.ne.s32.totalorder %s189, %s190
    %p202 = scmp.eq.s32.totalorder %s26, 7
    %p203 = por %p201, %p202
    %p205 = scmp.ne.s32.totalorder %s190, %s204
    %p206 = scmp.eq.s32.totalorder %s26, 0
    %p207 = por %p205, %p206
    %s208 = ssub.s32 %s20, %s27
    %p209 = scmp.eq.s32.totalorder %s208, 0
    %s211 = sadd.s32 %s210, 1
    %s212 = scalar_select %p209, %s210, %s211
    %p215 = pneg %p209
    %p216 = scmp.eq.s32.totalorder %s20, 7
    %p217 = por %p215, %p216
    %p218 = scmp.ne.s32.totalorder %s210, %s213
    %p219 = scmp.eq.s32.totalorder %s20, 0
    %p220 = por %p218, %p219
    %p221 = scmp.ne.s32.totalorder %s210, %s213
    %p222 = scmp.eq.s32.totalorder %s25, 7
    %p223 = por %p221, %p222
    %p224 = scmp.ne.s32.totalorder %s213, %s214
    %p225 = scmp.eq.s32.totalorder %s25, 0
    %p226 = por %p224, %p225
    %p227 = scmp.ne.s32.totalorder %s213, %s214
    %p228 = scmp.eq.s32.totalorder %s26, 7
    %p229 = por %p227, %p228
    %p231 = scmp.ne.s32.totalorder %s214, %s230
    %p232 = scmp.eq.s32.totalorder %s26, 0
    %p233 = por %p231, %p232
    %s234 = ssub.s32 7, %s20
    %s235 = ssub.s32 7, %s27
    %s236 = ssub.s32 %s234, %s235
    %p237 = scmp.eq.s32.totalorder %s236, 0
    %s239 = sadd.s32 %s238, 1
    %s240 = scalar_select %p237, %s238, %s239
    %p243 = pneg %p237
    %p244 = scmp.eq.s32.totalorder %s20, 7
    %p245 = por %p243, %p244
    %p246 = scmp.ne.s32.totalorder %s238, %s241
    %p247 = scmp.eq.s32.totalorder %s20, 0
    %p248 = por %p246, %p247
    %p249 = scmp.ne.s32.totalorder %s238, %s241
    %p250 = scmp.eq.s32.totalorder %s25, 7
    %p251 = por %p249, %p250
    %p252 = scmp.ne.s32.totalorder %s241, %s242
    %p253 = scmp.eq.s32.totalorder %s25, 0
    %p254 = por %p252, %p253
    %p255 = scmp.ne.s32.totalorder %s241, %s242
    %p256 = scmp.eq.s32.totalorder %s26, 7
    %p257 = por %p255, %p256
    %p259 = scmp.ne.s32.totalorder %s242, %s258
    %p260 = scmp.eq.s32.totalorder %s26, 0
    %p261 = por %p259, %p260
    %s263 = sadd.s32 %s262, 1
    %p266 = scmp.eq.s32.totalorder %s20, 7
    %p267 = scmp.ne.s32.totalorder %s262, %s264
    %p268 = scmp.eq.s32.totalorder %s20, 0
    %p269 = por %p267, %p268
    %p270 = scmp.ne.s32.totalorder %s262, %s264
    %p271 = scmp.eq.s32.totalorder %s25, 7
    %p272 = por %p270, %p271
    %p273 = scmp.ne.s32.totalorder %s264, %s265
    %p274 = scmp.eq.s32.totalorder %s25, 0
    %p275 = por %p273, %p274
    %p276 = scmp.ne.s32.totalorder %s264, %s265
    %p277 = scmp.eq.s32.totalorder %s26, 7
    %p278 = por %p276, %p277
    %p280 = scmp.ne.s32.totalorder %s265, %s279
    %p281 = scmp.eq.s32.totalorder %s26, 0
    %p282 = por %p280, %p281
    %s284 = sadd.s32 %s283, 1
    %p287 = scmp.eq.s32.totalorder %s20, 7
    %p288 = scmp.ne.s32.totalorder %s283, %s285
    %p289 = scmp.eq.s32.totalorder %s20, 0
    %p290 = por %p288, %p289
    %p291 = scmp.ne.s32.totalorder %s283, %s285
    %p292 = scmp.eq.s32.totalorder %s25, 7
    %p293 = por %p291, %p292
    %p294 = scmp.ne.s32.totalorder %s285, %s286
    %p295 = scmp.eq.s32.totalorder %s25, 0
    %p296 = por %p294, %p295
    %p297 = scmp.ne.s32.totalorder %s285, %s286
    %p298 = scmp.eq.s32.totalorder %s26, 7
    %p299 = por %p297, %p298
    %p301 = scmp.ne.s32.totalorder %s286, %s300
    %p302 = scmp.eq.s32.totalorder %s26, 0
    %p303 = por %p301, %p302
    %s305 = sadd.s32 %s304, 1
    %p308 = scmp.eq.s32.totalorder %s20, 7
    %p309 = scmp.ne.s32.totalorder %s304, %s306
    %p310 = scmp.eq.s32.totalorder %s20, 0
    %p311 = por %p309, %p310
    %p312 = scmp.ne.s32.totalorder %s304, %s306
    %p313 = scmp.eq.s32.totalorder %s25, 7
    %p314 = por %p312, %p313
    %p315 = scmp.ne.s32.totalorder %s306, %s307
    %p316 = scmp.eq.s32.totalorder %s25, 0
    %p317 = por %p315, %p316
    %p318 = scmp.ne.s32.totalorder %s306, %s307
    %p319 = scmp.eq.s32.totalorder %s26, 7
    %p320 = por %p318, %p319
    %p322 = scmp.ne.s32.totalorder %s307, %s321
    %p323 = scmp.eq.s32.totalorder %s26, 0
    %p324 = por %p322, %p323
    %s326 = sadd.s32 %s325, 1
    %p329 = scmp.eq.s32.totalorder %s20, 7
    %p330 = scmp.ne.s32.totalorder %s325, %s327
    %p331 = scmp.eq.s32.totalorder %s20, 0
    %p332 = por %p330, %p331
    %p333 = scmp.ne.s32.totalorder %s325, %s327
    %p334 = scmp.eq.s32.totalorder %s25, 7
    %p335 = por %p333, %p334
    %p336 = scmp.ne.s32.totalorder %s327, %s328
    %p337 = scmp.eq.s32.totalorder %s25, 0
    %p338 = por %p336, %p337
    %p339 = scmp.ne.s32.totalorder %s327, %s328
    %p340 = scmp.eq.s32.totalorder %s26, 7
    %p341 = por %p339, %p340
    %p343 = scmp.ne.s32.totalorder %s328, %s342
    %p344 = scmp.eq.s32.totalorder %s26, 0
    %p345 = por %p343, %p344
    %p346 = scmp.le.s32.totalorder 1, %s20
    %p347 = scmp.lt.s32.totalorder %s20, 9
    %p348 = pnand %p346, %p347
    %p349 = pneg %p348
    // Predicated region
    $region9: #{_lambda_.2} parent=5 // pred_check
      _
    $region10: #{_lambda_.2} parent=5 // pred_check_branch
      %351 = sbr.rel (%p348) target = $region12
    $region11: #{_lambda_.2} parent=5 // pred_region
      %s352 = ssub.s32 %s20, 1
      // Predicated region
      $region13: #{_lambda_.2} parent=11 // pred_check
        %p353 = pneg %p95
      $region14: #{_lambda_.2} parent=11 // pred_check_branch
        %355 = sbr.rel (%p353) target = $region16
      $region15: #{_lambda_.2} parent=11 // pred_region
        _
      $region16: #{_lambda_.2} parent=11 // pred_fallthru
        _
      // Predicated region
      $region17: #{_lambda_.2} parent=11 // pred_check
        %p356 = pneg %p116
      $region18: #{_lambda_.2} parent=11 // pred_check_branch
        %358 = sbr.rel (%p356) target = $region20
      $region19: #{_lambda_.2} parent=11 // pred_region
        _
      $region20: #{_lambda_.2} parent=11 // pred_fallthru
        _
      // Predicated region
      $region21: #{_lambda_.2} parent=11 // pred_check
        %p359 = pneg %p137
      $region22: #{_lambda_.2} parent=11 // pred_check_branch
        %361 = sbr.rel (%p359) target = $region24
      $region23: #{_lambda_.2} parent=11 // pred_region
        _
      $region24: #{_lambda_.2} parent=11 // pred_fallthru
        _
      // Predicated region
      $region25: #{_lambda_.2} parent=11 // pred_check
        %p362 = pneg %p158
      $region26: #{_lambda_.2} parent=11 // pred_check_branch
        %364 = sbr.rel (%p362) target = $region28
      $region27: #{_lambda_.2} parent=11 // pred_region
        _
      $region28: #{_lambda_.2} parent=11 // pred_fallthru
        _
      // Predicated region
      $region29: #{_lambda_.2} parent=11 // pred_check
        %p365 = pneg %p179
      $region30: #{_lambda_.2} parent=11 // pred_check_branch
        %367 = sbr.rel (%p365) target = $region32
      $region31: #{_lambda_.2} parent=11 // pred_region
        _
      $region32: #{_lambda_.2} parent=11 // pred_fallthru
        _
      // Predicated region
      $region33: #{_lambda_.2} parent=11 // pred_check
        %p368 = pneg %p200
      $region34: #{_lambda_.2} parent=11 // pred_check_branch
        %370 = sbr.rel (%p368) target = $region36
      $region35: #{_lambda_.2} parent=11 // pred_region
        _
      $region36: #{_lambda_.2} parent=11 // pred_fallthru
        _
    $region12: #{_lambda_.2} parent=5 // pred_fallthru
      _
    %p371 = scmp.lt.s32.totalorder %s20, 8
    // Predicated region
    $region37: #{_lambda_.2} parent=5 // pred_check
      %p372 = pneg %p371
    $region38: #{_lambda_.2} parent=5 // pred_check_branch
      %374 = sbr.rel (%p372) target = $region40
    $region39: #{_lambda_.2} parent=5 // pred_region
      // Predicated region
      $region41: #{_lambda_.2} parent=39 // pred_check
        %p375 = pneg %p40
      $region42: #{_lambda_.2} parent=39 // pred_check_branch
        %377 = sbr.rel (%p375) target = $region44
      $region43: #{_lambda_.2} parent=39 // pred_region
        %p378 = scmp.lt.s32.totalorder %s20, 7
        %s379 = scalar_select %p378, %s20, 7
        %s380 = scalar_lea.vmem %s0, %s379
      $region44: #{_lambda_.2} parent=39 // pred_fallthru
        _
      // Predicated region
      $region45: #{_lambda_.2} parent=39 // pred_check
        %p381 = pneg %p68
      $region46: #{_lambda_.2} parent=39 // pred_check_branch
        %383 = sbr.rel (%p381) target = $region48
      $region47: #{_lambda_.2} parent=39 // pred_region
        %s384 = ssub.s32 7, %s20
        %p385 = scmp.lt.s32.totalorder %s384, 7
        %s386 = scalar_select %p385, %s384, 7
        %s387 = scalar_lea.vmem %s1, %s386
        %s388 = ssub.s32 7, %s20
      $region48: #{_lambda_.2} parent=39 // pred_fallthru
        _
    $region40: #{_lambda_.2} parent=5 // pred_fallthru
      _
    %p389 = scmp.le.s32.totalorder 1, %s20
    %p390 = scmp.lt.s32.totalorder %s20, 9
    %p391 = pnand %p389, %p390
    %p392 = pneg %p391
    // Predicated region
    $region49: #{_lambda_.2} parent=5 // pred_check
      _
    $region50: #{_lambda_.2} parent=5 // pred_check_branch
      %394 = sbr.rel (%p391) target = $region52
    $region51: #{_lambda_.2} parent=5 // pred_region
      %s395 = ssub.s32 %s20, 1
      %p396 = scmp.lt.s32.totalorder %s25, 7
      %s397 = scalar_select %p396, %s25, 7
      %s398 = scalar_lea.vmem %s0, %s397
      %p399 = pneg %p46
      %p400 = pneg %p43
      %s401 = ssub.s32 7, %s25
      %p402 = scmp.lt.s32.totalorder %s401, 7
      %s403 = scalar_select %p402, %s401, 7
      %s404 = scalar_lea.vmem %s1, %s403
      %p405 = pneg %p74
      %p406 = pneg %p71
      %p407 = pneg %p95
      %p408 = pneg %p92
      %p409 = pneg %p116
      %p410 = pneg %p113
      %p411 = pneg %p137
      %p412 = pneg %p134
      %p413 = pneg %p158
      %p414 = pneg %p155
      %p415 = pneg %p179
      %p416 = pneg %p176
      %p417 = pneg %p200
      %p418 = pneg %p197
      %p419 = pneg %p226
      %p420 = pneg %p223
      %p421 = scmp.lt.s32.totalorder %s25, 7
      %s422 = scalar_select %p421, %s25, 7
      %s423 = scalar_lea.vmem %s8, %s422
      %p424 = pneg %p254
      %p425 = pneg %p251
      %s426 = ssub.s32 7, %s25
      %p427 = scmp.lt.s32.totalorder %s426, 7
      %s428 = scalar_select %p427, %s426, 7
      %s429 = scalar_lea.vmem %s9, %s428
      %p430 = pneg %p275
      %p431 = pneg %p272
      %p432 = pneg %p296
      %p433 = pneg %p293
      %p434 = pneg %p317
      %p435 = pneg %p314
      %p436 = pneg %p338
      %p437 = pneg %p335
      %p438 = scmp.lt.s32.totalorder %s25, 7
      %s439 = scalar_select %p438, %s25, 7
      %s440 = scalar_lea.vmem %s0, %s439
      %s441 = ssub.s32 7, %s25
      %p442 = scmp.lt.s32.totalorder %s441, 7
      %s443 = scalar_select %p442, %s441, 7
      %s444 = scalar_lea.vmem %s1, %s443
      %s445 = ssub.s32 7, %s25
      %p446 = scmp.lt.s32.totalorder %s25, 7
      %s447 = scalar_select %p446, %s25, 7
      %s448 = scalar_lea.vmem %s8, %s447
      %s449 = ssub.s32 7, %s25
      %p450 = scmp.lt.s32.totalorder %s449, 7
      %s451 = scalar_select %p450, %s449, 7
      %s452 = scalar_lea.vmem %s9, %s451
      %s453 = ssub.s32 7, %s25
      %p455 = scmp.eq.s32.totalorder %s25, 0
      // Predicated region
      $region53: #{_lambda_.2} parent=51 // pred_check
        %p456 = pneg %p455
      $region54: #{_lambda_.2} parent=51 // pred_check_branch
        %458 = sbr.rel (%p456) target = $region56
      $region55: #{_lambda_.2} parent=51 // pred_region
        %vm459 = vcmask 123904
        %460 = vst.msk [vmem:[%s10] sm:$0x3] %vm459, 0.0
        %461 = vst.msk [vmem:[%s11] sm:$0x3] %vm459, 0.0
        %462 = vst.msk [vmem:[%s12] sm:$0x3] %vm459, 0.0
        %463 = vst.msk [vmem:[%s13] sm:$0x3] %vm459, 0.0
      $region56: #{_lambda_.2} parent=51 // pred_fallthru
        _
      %v464 = vld [vmem:[%s440] sm:$0x1]
      %v465 = vld [vmem:[%s10] sm:$0x3]
      %v466 = vld [vmem:[%s11] sm:$0x3]
      %v467 = vld [vmem:[%s2] sm:$0xf]
      %v468 = vld [vmem:[%s2 + $0x4] sm:$0xf]
      %v469 = vpack.c.bf16 %v465, %v465
      %v470 = vld [vmem:[%s3] sm:$0xf]
      %v471 = vld [vmem:[%s3 + $0x4] sm:$0xf]
      %v474 = vunpack.c.l.b16 %v470
      %v475 = vunpack.c.l.b16 %v471
      %v476 = vpack.c.b16 %v475, %v474
      %vm478 = vcmask 130048
      %v480 = vsel %vm478, %v469, 0
      %482 = vmatpush.bf16.msra.mxu0 0
      %483 = vmatpush.bf16.msra.mxu0 0
      %484 = vmatpush.bf16.msra.mxu0 0
      %485 = vmatpush.bf16.msra.mxu0 0
      %486 = vmatpush.bf16.msra.mxu0 0
      %487 = vmatpush.bf16.msra.mxu0 0
      %488 = vmatpush.bf16.msra.mxu0 0
      %489 = vmatpush.bf16.msra.mxu0 %v476
      %490 = vmatmul.bf16.gmra.mxu0 %v480
      %v491 = vpop.f32.mrf.mxu0
      %v492 = vadd.f32 0.0, %v491
      %v493 = vpop.f32.mrf.mxu0
      %494 = vdwg.mxu0
      %v497 = vunpack.c.l.b16 %v467
      %v498 = vunpack.c.l.b16 %v468
      %v499 = vpack.c.b16 %v498, %v497
      %v502 = vsel %vm478, %v464, 0
      %504 = vmatpush.bf16.msra.mxu0 0
      %505 = vmatpush.bf16.msra.mxu0 0
      %506 = vmatpush.bf16.msra.mxu0 0
      %507 = vmatpush.bf16.msra.mxu0 0
      %508 = vmatpush.bf16.msra.mxu0 0
      %509 = vmatpush.bf16.msra.mxu0 0
      %510 = vmatpush.bf16.msra.mxu0 0
      %511 = vmatpush.bf16.msra.mxu0 %v499
      %512 = vmatmul.bf16.gmra.mxu0 %v502
      %v513 = vpop.f32.mrf.mxu0
      %v514 = vadd.f32 %v492, %v513
      %v515 = vpop.f32.mrf.mxu0
      %516 = vdwg.mxu0
      %v517 = vld [vmem:[%s4] sm:$0x1]
      %v519 = vperm.slane %v517, 0
      %v521 = vadd.f32 %v514, %v519
      %v522 = vxor.u32 %v521, 2147483648
      %v523 = vmul.f32 %v522, 1.442695
      %v524 = vpow.pop %v523
      %v525 = vadd.f32 %v524, 1.0
      %v526 = vrcp.pop %v525
      %v527 = vmul.f32 %v525, %v526
      %v528 = vsub.f32 1.0, %v527
      %v529 = vmul.f32 %v526, %v528
      %v530 = vadd.f32 %v526, %v529
      %vm531 = vweird.f32 %v525
      %vm532 = vweird.f32 %v526
      %vm533 = vmor %vm531, %vm532
      %v534 = vsel %vm533, %v526, %v530
      %v535 = vand.u32 2147483647, %v525
      %vm536 = vcmp.eq.f32.partialorder %v535, 8.507059e+37
      %v537 = vand.u32 %v525, 2147483648
      %v538 = vor.u32 1.1754944e-38, %v537
      %v539 = vsel %vm536, %v538, %v534
      %v540 = vmul.f32 1.0, %v539
      %v541 = vtanh.pop %v521
      %543 = vrot.lane.b32.xlu0 %v466, 16
      %v544 = vpop.permute.xlu0 %543
      %v546 = vmul.f32 %v540, %v544
      %548 = vrot.lane.b32.xlu0 %v541, 96
      %v549 = vpop.permute.xlu0 %548
      %v551 = vmul.f32 %v540, %v549
      %553 = vrot.lane.b32.xlu0 %v551, 16
      %v554 = vpop.permute.xlu0 %553
      %v556 = vadd.f32 %v546, %v554
      %v557 = vtanh.pop %v556
      %559 = vrot.lane.b32.xlu0 %v557, 32
      %v560 = vpop.permute.xlu0 %559
      %v562 = vmul.f32 %v540, %v560
      %v563 = vld [vmem:[%s444] sm:$0x1]
      %v564 = vld [vmem:[%s12] sm:$0x3]
      %v565 = vld [vmem:[%s13] sm:$0x3]
      %v566 = vld [vmem:[%s5] sm:$0xf]
      %v567 = vld [vmem:[%s5 + $0x4] sm:$0xf]
      %v568 = vpack.c.bf16 %v564, %v564
      %v569 = vld [vmem:[%s6] sm:$0xf]
      %v570 = vld [vmem:[%s6 + $0x4] sm:$0xf]
      %v573 = vunpack.c.l.b16 %v569
      %v574 = vunpack.c.l.b16 %v570
      %v575 = vpack.c.b16 %v574, %v573
      %v578 = vsel %vm478, %v568, 0
      %580 = vmatpush.bf16.msra.mxu0 0
      %581 = vmatpush.bf16.msra.mxu0 0
      %582 = vmatpush.bf16.msra.mxu0 0
      %583 = vmatpush.bf16.msra.mxu0 0
      %584 = vmatpush.bf16.msra.mxu0 0
      %585 = vmatpush.bf16.msra.mxu0 0
      %586 = vmatpush.bf16.msra.mxu0 0
      %587 = vmatpush.bf16.msra.mxu0 %v575
      %588 = vmatmul.bf16.gmra.mxu0 %v578
      %v589 = vpop.f32.mrf.mxu0
      %v590 = vadd.f32 0.0, %v589
      %v591 = vpop.f32.mrf.mxu0
      %592 = vdwg.mxu0
      %v595 = vunpack.c.l.b16 %v566
      %v596 = vunpack.c.l.b16 %v567
      %v597 = vpack.c.b16 %v596, %v595
      %v600 = vsel %vm478, %v563, 0
      %602 = vmatpush.bf16.msra.mxu0 0
      %603 = vmatpush.bf16.msra.mxu0 0
      %604 = vmatpush.bf16.msra.mxu0 0
      %605 = vmatpush.bf16.msra.mxu0 0
      %606 = vmatpush.bf16.msra.mxu0 0
      %607 = vmatpush.bf16.msra.mxu0 0
      %608 = vmatpush.bf16.msra.mxu0 0
      %609 = vmatpush.bf16.msra.mxu0 %v597
      %610 = vmatmul.bf16.gmra.mxu0 %v600
      %v611 = vpop.f32.mrf.mxu0
      %v612 = vadd.f32 %v590, %v611
      %v613 = vpop.f32.mrf.mxu0
      %614 = vdwg.mxu0
      %v615 = vld [vmem:[%s7] sm:$0x1]
      %v617 = vperm.slane %v615, 0
      %v619 = vadd.f32 %v612, %v617
      %v620 = vxor.u32 %v619, 2147483648
      %v621 = vmul.f32 %v620, 1.442695
      %v622 = vpow.pop %v621
      %v623 = vadd.f32 %v622, 1.0
      %v624 = vrcp.pop %v623
      %v625 = vmul.f32 %v623, %v624
      %v626 = vsub.f32 1.0, %v625
      %v627 = vmul.f32 %v624, %v626
      %v628 = vadd.f32 %v624, %v627
      %vm629 = vweird.f32 %v623
      %vm630 = vweird.f32 %v624
      %vm631 = vmor %vm629, %vm630
      %v632 = vsel %vm631, %v624, %v628
      %v633 = vand.u32 2147483647, %v623
      %vm634 = vcmp.eq.f32.partialorder %v633, 8.507059e+37
      %v635 = vand.u32 %v623, 2147483648
      %v636 = vor.u32 1.1754944e-38, %v635
      %v637 = vsel %vm634, %v636, %v632
      %v638 = vmul.f32 1.0, %v637
      %v639 = vtanh.pop %v619
      %641 = vrot.lane.b32.xlu0 %v565, 16
      %v642 = vpop.permute.xlu0 %641
      %v644 = vmul.f32 %v638, %v642
      %646 = vrot.lane.b32.xlu0 %v639, 96
      %v647 = vpop.permute.xlu0 %646
      %v649 = vmul.f32 %v638, %v647
      %651 = vrot.lane.b32.xlu0 %v649, 16
      %v652 = vpop.permute.xlu0 %651
      %v654 = vadd.f32 %v644, %v652
      %v655 = vtanh.pop %v654
      %657 = vrot.lane.b32.xlu0 %v655, 32
      %v658 = vpop.permute.xlu0 %657
      %v660 = vmul.f32 %v638, %v658
      %662 = vrot.lane.b32.xlu0 %v562, 80
      %v663 = vpop.permute.xlu0 %662
      %vm665 = vcmask 123904
      %666 = vst.msk [vmem:[%s10] sm:$0x3] %vm665, %v663
      %668 = vrot.lane.b32.xlu0 %v556, 112
      %v669 = vpop.permute.xlu0 %668
      %671 = vst.msk [vmem:[%s11] sm:$0x3] %vm665, %v669
      %673 = vrot.lane.b32.xlu0 %v660, 80
      %v674 = vpop.permute.xlu0 %673
      %676 = vst.msk [vmem:[%s12] sm:$0x3] %vm665, %v674
      %678 = vrot.lane.b32.xlu0 %v654, 112
      %v679 = vpop.permute.xlu0 %678
      %681 = vst.msk [vmem:[%s13] sm:$0x3] %vm665, %v679
      %v682 = vpack.c.bf16 %v562, %v562
      %v684 = vrot.slane %v682, 3
      %vm685 = vcmask 1040384
      %v688 = vsel %vm685, %v682, %v684
      %690 = vrot.lane.b32.xlu0 %v688, 80
      %v691 = vpop.permute.xlu0 %690
      %vm693 = vcmask 122880
      %694 = vst.msk [vmem:[%s448] sm:$0x1] %vm693, %v691
      %v695 = vpack.c.bf16 %v660, %v660
      %v697 = vrot.slane %v695, 3
      %v700 = vsel %vm685, %v695, %v697
      %702 = vrot.lane.b32.xlu0 %v700, 80
      %v703 = vpop.permute.xlu0 %702
      %705 = vst.msk [vmem:[%s452] sm:$0x1] %vm693, %v703
      %p706 = scmp.lt.s32.totalorder %s25, 7
      %s707 = scalar_select %p706, %s25, 7
      %s708 = scalar_lea.vmem %s8, %s707
      %s709 = ssub.s32 7, %s25
      %p710 = scmp.lt.s32.totalorder %s709, 7
      %s711 = scalar_select %p710, %s709, 7
      %s712 = scalar_lea.vmem %s9, %s711
      // Predicated region
      $region57: #{_lambda_.2} parent=51 // pred_check
        %p713 = pneg %p223
      $region58: #{_lambda_.2} parent=51 // pred_check_branch
        %715 = sbr.rel (%p713) target = $region60
      $region59: #{_lambda_.2} parent=51 // pred_region
        _
      $region60: #{_lambda_.2} parent=51 // pred_fallthru
        _
      // Predicated region
      $region61: #{_lambda_.2} parent=51 // pred_check
        %p716 = pneg %p251
      $region62: #{_lambda_.2} parent=51 // pred_check_branch
        %718 = sbr.rel (%p716) target = $region64
      $region63: #{_lambda_.2} parent=51 // pred_region
        %s719 = ssub.s32 7, %s25
      $region64: #{_lambda_.2} parent=51 // pred_fallthru
        _
      // Predicated region
      $region65: #{_lambda_.2} parent=51 // pred_check
        %p720 = pneg %p272
      $region66: #{_lambda_.2} parent=51 // pred_check_branch
        %722 = sbr.rel (%p720) target = $region68
      $region67: #{_lambda_.2} parent=51 // pred_region
        _
      $region68: #{_lambda_.2} parent=51 // pred_fallthru
        _
      // Predicated region
      $region69: #{_lambda_.2} parent=51 // pred_check
        %p723 = pneg %p293
      $region70: #{_lambda_.2} parent=51 // pred_check_branch
        %725 = sbr.rel (%p723) target = $region72
      $region71: #{_lambda_.2} parent=51 // pred_region
        _
      $region72: #{_lambda_.2} parent=51 // pred_fallthru
        _
      // Predicated region
      $region73: #{_lambda_.2} parent=51 // pred_check
        %p726 = pneg %p314
      $region74: #{_lambda_.2} parent=51 // pred_check_branch
        %728 = sbr.rel (%p726) target = $region76
      $region75: #{_lambda_.2} parent=51 // pred_region
        _
      $region76: #{_lambda_.2} parent=51 // pred_fallthru
        _
      // Predicated region
      $region77: #{_lambda_.2} parent=51 // pred_check
        %p729 = pneg %p335
      $region78: #{_lambda_.2} parent=51 // pred_check_branch
        %731 = sbr.rel (%p729) target = $region80
      $region79: #{_lambda_.2} parent=51 // pred_region
        _
      $region80: #{_lambda_.2} parent=51 // pred_fallthru
        _
      // Predicated region
      $region81: #{_lambda_.2} parent=51 // pred_check
        %p732 = pneg %p272
      $region82: #{_lambda_.2} parent=51 // pred_check_branch
        %734 = sbr.rel (%p732) target = $region84
      $region83: #{_lambda_.2} parent=51 // pred_region
        _
      $region84: #{_lambda_.2} parent=51 // pred_fallthru
        _
      // Predicated region
      $region85: #{_lambda_.2} parent=51 // pred_check
        %p735 = pneg %p293
      $region86: #{_lambda_.2} parent=51 // pred_check_branch
        %737 = sbr.rel (%p735) target = $region88
      $region87: #{_lambda_.2} parent=51 // pred_region
        _
      $region88: #{_lambda_.2} parent=51 // pred_fallthru
        _
      // Predicated region
      $region89: #{_lambda_.2} parent=51 // pred_check
        %p738 = pneg %p314
      $region90: #{_lambda_.2} parent=51 // pred_check_branch
        %740 = sbr.rel (%p738) target = $region92
      $region91: #{_lambda_.2} parent=51 // pred_region
        _
      $region92: #{_lambda_.2} parent=51 // pred_fallthru
        _
      // Predicated region
      $region93: #{_lambda_.2} parent=51 // pred_check
        %p741 = pneg %p335
      $region94: #{_lambda_.2} parent=51 // pred_check_branch
        %743 = sbr.rel (%p741) target = $region96
      $region95: #{_lambda_.2} parent=51 // pred_region
        _
      $region96: #{_lambda_.2} parent=51 // pred_fallthru
        _
    $region52: #{_lambda_.2} parent=5 // pred_fallthru
      _
    %p744 = scmp.le.s32.totalorder 2, %s20
    // Predicated region
    $region97: #{_lambda_.2} parent=5 // pred_check
      %p745 = pneg %p744
    $region98: #{_lambda_.2} parent=5 // pred_check_branch
      %747 = sbr.rel (%p745) target = $region100
    $region99: #{_lambda_.2} parent=5 // pred_region
      %s748 = ssub.s32 %s20, 2
      // Predicated region
      $region101: #{_lambda_.2} parent=99 // pred_check
        %p749 = pneg %p229
      $region102: #{_lambda_.2} parent=99 // pred_check_branch
        %751 = sbr.rel (%p749) target = $region104
      $region103: #{_lambda_.2} parent=99 // pred_region
        %p752 = scmp.lt.s32.totalorder %s26, 7
        %s753 = scalar_select %p752, %s26, 7
        %s754 = scalar_lea.vmem %s8, %s753
      $region104: #{_lambda_.2} parent=99 // pred_fallthru
        _
      // Predicated region
      $region105: #{_lambda_.2} parent=99 // pred_check
        %p755 = pneg %p257
      $region106: #{_lambda_.2} parent=99 // pred_check_branch
        %757 = sbr.rel (%p755) target = $region108
      $region107: #{_lambda_.2} parent=99 // pred_region
        %s758 = ssub.s32 7, %s26
        %p759 = scmp.lt.s32.totalorder %s758, 7
        %s760 = scalar_select %p759, %s758, 7
        %s761 = scalar_lea.vmem %s9, %s760
      $region108: #{_lambda_.2} parent=99 // pred_fallthru
        _
    $region100: #{_lambda_.2} parent=5 // pred_fallthru
      _
  $region6: #{_lambda_.2} parent=0 // loop_footer
    %s24 = sadd.s32 1, %s20
  $region7: #{_lambda_.2} parent=0 // loop_footer_branch
    %19 = sbr.rel target = $region3
  $region8: #{_lambda_.2} parent=0 // loop_exit
    _

// kernel: _lambda_.3
$region0: #{_lambda_.3}
  #allocation0 [shape = 'u32[]', space=smem, size = 0x4, offset = 0x4, fixed_abs, tag = 'smem constant byte address 0x4 - core index']
  #allocation1 [shape = 'u32[72,128]{1,0:T(1,128)}', space=vmem, size = 0x9000, scoped, tag = 'internal scratch']
  #allocation2 [shape = 'f32[2,32]{1,0:T(2,128)}', space=vmem, size = 0x400, scoped, tag = 'scratch operand']
  #allocation3 [shape = 'f32[2,32]{1,0:T(2,128)}', space=vmem, size = 0x400, scoped, tag = 'scratch operand']
  #allocation4 [shape = 'bf16[2,16]{1,0:T(2,128)(2,1)}', space=vmem, size = 0x200, scoped, tag = 'scratch operand']
  %s0 = inlined_call_operand.vmem [shape: bf16[2,16], index: 0, kind: input, shape index: {}]
  %s1 = inlined_call_operand.vmem [shape: f32[2,32], index: 1, kind: input, shape index: {}]
  %s2 = inlined_call_operand.vmem [shape: f32[2,32], index: 2, kind: input, shape index: {}]
  %s3 = inlined_call_operand.vmem [shape: bf16[2,8,32], index: 3, kind: input, shape index: {}]
  %s4 = inlined_call_operand.vmem [shape: bf16[28,16], index: 4, kind: input, shape index: {}]
  %s5 = inlined_call_operand.vmem [shape: bf16[16,128], index: 5, kind: input, shape index: {}]
  %s6 = inlined_call_operand.vmem [shape: bf16[32,128], index: 6, kind: input, shape index: {}]
  %s7 = inlined_call_operand.vmem [shape: f32[1,128], index: 7, kind: input, shape index: {}]
  %s8 = inlined_call_operand.vmem [shape: bf16[32,32], index: 8, kind: input, shape index: {}]
  %s9 = inlined_call_operand.vmem [shape: bf16[64,32], index: 9, kind: input, shape index: {}]
  %s10 = inlined_call_operand.vmem [shape: bf16[32,128], index: 10, kind: input, shape index: {}]
  %s11 = inlined_call_operand.vmem [shape: f32[1,128], index: 11, kind: input, shape index: {}]
  %s12 = inlined_call_operand.hbm [shape: f32[6,2,128], index: 12, kind: output, shape index: {}]
  %s13 = sld [smem:[#allocation0]]
  $region85: #{_lambda_.3} parent=0
    _
  %s15 = ssub.s32 1, %s13
  %s16 = scalar_select 0, %s15, %s13
  $region1: #{_lambda_.3} parent=0
    #allocation5 [shape = 'u8[2048]{0}', space=vmem, size = 0x800, scoped, tag = 'output window, operand 0']
    #allocation6 [shape = 's32[2]{0}', space=sflag, size = 0x8, scoped, tag = 'scoped memory for _lambda_.3']
    %17 = vsyncpa [#allocation6], 0
    %s18 = scalar_lea.sflag [#allocation6], 1
    %19 = vsyncpa %s18, 0
    loop: start=0, step=1, limit=8
    $region2: #{_lambda_.3} parent=1 // loop_pre_header
      _
    $region3: #{_lambda_.3} parent=1 // loop_header
      %s21 = sphi 0, %s25
      %p22 = scmp.ge.s32.totalorder %s21, 8
      %s29 = sphi 0, %s29
      %s31 = sphi 0, %s29
      %s32 = sphi 0, %s31
      %s46 = sphi 0, %s32
      %s50 = sphi 0, %s50
      %s52 = sphi 0, %s50
      %s53 = sphi 0, %s52
      %s67 = sphi 0, %s53
      %s71 = sphi 0, %s71
      %s73 = sphi 0, %s71
      %s74 = sphi 0, %s73
      %s88 = sphi 0, %s74
      %s92 = sphi 0, %s92
      %s94 = sphi 0, %s92
      %s95 = sphi 0, %s94
      %s109 = sphi 0, %s95
      %s113 = sphi 0, %s113
      %s115 = sphi 0, %s113
      %s116 = sphi 0, %s115
      %s130 = sphi 0, %s116
      %s134 = sphi 0, %s134
      %s136 = sphi 0, %s134
      %s137 = sphi 0, %s136
      %s151 = sphi 0, %s137
      %s155 = sphi 0, %s155
      %s157 = sphi 0, %s155
      %s158 = sphi 0, %s157
      %s172 = sphi 0, %s158
      %s176 = sphi 0, %s176
      %s178 = sphi 0, %s176
      %s179 = sphi 0, %s178
      %s193 = sphi 0, %s179
      %s197 = sphi 0, %s197
      %s199 = sphi 0, %s197
      %s200 = sphi 0, %s199
      %s214 = sphi 0, %s200
      %s218 = sphi 0, %s218
      %s220 = sphi 0, %s218
      %s221 = sphi 0, %s220
      %s235 = sphi 0, %s221
      %s239 = sphi 0, %s239
      %s241 = sphi 0, %s239
      %s242 = sphi 0, %s241
      %s256 = sphi 0, %s242
      %s260 = sphi 0, %s260
      %s262 = sphi 0, %s260
      %s263 = sphi 0, %s262
      %s277 = sphi 0, %s263
      %s283 = sphi 0, %s285
      %s286 = sphi 0, %s283
      %s287 = sphi 0, %s286
      %s303 = sphi 0, %s287
    $region4: #{_lambda_.3} parent=1 // loop_header_branch
      %24 = sbr.rel (%p22) target = $region8
    $region5: #{_lambda_.3} parent=1 // loop_body
      %s26 = ssub.s32 %s21, 1
      %s27 = ssub.s32 %s21, 2
      %s28 = sadd.s32 %s21, 1
      %s30 = sadd.s32 %s29, 1
      %p33 = scmp.eq.s32.totalorder %s21, 5
      %p34 = scmp.ne.s32.totalorder %s29, %s31
      %p35 = scmp.eq.s32.totalorder %s21, 0
      %p36 = por %p34, %p35
      %p37 = scmp.ne.s32.totalorder %s29, %s31
      %p38 = scmp.eq.s32.totalorder %s26, 5
      %p39 = por %p37, %p38
      %p40 = scmp.ne.s32.totalorder %s31, %s32
      %p41 = scmp.eq.s32.totalorder %s26, 0
      %p42 = por %p40, %p41
      %p43 = scmp.ne.s32.totalorder %s31, %s32
      %p44 = scmp.eq.s32.totalorder %s27, 5
      %p45 = por %p43, %p44
      %p47 = scmp.ne.s32.totalorder %s32, %s46
      %p48 = scmp.eq.s32.totalorder %s27, 0
      %p49 = por %p47, %p48
      %s51 = sadd.s32 %s50, 1
      %p54 = scmp.eq.s32.totalorder %s21, 5
      %p55 = scmp.ne.s32.totalorder %s50, %s52
      %p56 = scmp.eq.s32.totalorder %s21, 0
      %p57 = por %p55, %p56
      %p58 = scmp.ne.s32.totalorder %s50, %s52
      %p59 = scmp.eq.s32.totalorder %s26, 5
      %p60 = por %p58, %p59
      %p61 = scmp.ne.s32.totalorder %s52, %s53
      %p62 = scmp.eq.s32.totalorder %s26, 0
      %p63 = por %p61, %p62
      %p64 = scmp.ne.s32.totalorder %s52, %s53
      %p65 = scmp.eq.s32.totalorder %s27, 5
      %p66 = por %p64, %p65
      %p68 = scmp.ne.s32.totalorder %s53, %s67
      %p69 = scmp.eq.s32.totalorder %s27, 0
      %p70 = por %p68, %p69
      %s72 = sadd.s32 %s71, 1
      %p75 = scmp.eq.s32.totalorder %s21, 5
      %p76 = scmp.ne.s32.totalorder %s71, %s73
      %p77 = scmp.eq.s32.totalorder %s21, 0
      %p78 = por %p76, %p77
      %p79 = scmp.ne.s32.totalorder %s71, %s73
      %p80 = scmp.eq.s32.totalorder %s26, 5
      %p81 = por %p79, %p80
      %p82 = scmp.ne.s32.totalorder %s73, %s74
      %p83 = scmp.eq.s32.totalorder %s26, 0
      %p84 = por %p82, %p83
      %p85 = scmp.ne.s32.totalorder %s73, %s74
      %p86 = scmp.eq.s32.totalorder %s27, 5
      %p87 = por %p85, %p86
      %p89 = scmp.ne.s32.totalorder %s74, %s88
      %p90 = scmp.eq.s32.totalorder %s27, 0
      %p91 = por %p89, %p90
      %s93 = sadd.s32 %s92, 1
      %p96 = scmp.eq.s32.totalorder %s21, 5
      %p97 = scmp.ne.s32.totalorder %s92, %s94
      %p98 = scmp.eq.s32.totalorder %s21, 0
      %p99 = por %p97, %p98
      %p100 = scmp.ne.s32.totalorder %s92, %s94
      %p101 = scmp.eq.s32.totalorder %s26, 5
      %p102 = por %p100, %p101
      %p103 = scmp.ne.s32.totalorder %s94, %s95
      %p104 = scmp.eq.s32.totalorder %s26, 0
      %p105 = por %p103, %p104
      %p106 = scmp.ne.s32.totalorder %s94, %s95
      %p107 = scmp.eq.s32.totalorder %s27, 5
      %p108 = por %p106, %p107
      %p110 = scmp.ne.s32.totalorder %s95, %s109
      %p111 = scmp.eq.s32.totalorder %s27, 0
      %p112 = por %p110, %p111
      %s114 = sadd.s32 %s113, 1
      %p117 = scmp.eq.s32.totalorder %s21, 5
      %p118 = scmp.ne.s32.totalorder %s113, %s115
      %p119 = scmp.eq.s32.totalorder %s21, 0
      %p120 = por %p118, %p119
      %p121 = scmp.ne.s32.totalorder %s113, %s115
      %p122 = scmp.eq.s32.totalorder %s26, 5
      %p123 = por %p121, %p122
      %p124 = scmp.ne.s32.totalorder %s115, %s116
      %p125 = scmp.eq.s32.totalorder %s26, 0
      %p126 = por %p124, %p125
      %p127 = scmp.ne.s32.totalorder %s115, %s116
      %p128 = scmp.eq.s32.totalorder %s27, 5
      %p129 = por %p127, %p128
      %p131 = scmp.ne.s32.totalorder %s116, %s130
      %p132 = scmp.eq.s32.totalorder %s27, 0
      %p133 = por %p131, %p132
      %s135 = sadd.s32 %s134, 1
      %p138 = scmp.eq.s32.totalorder %s21, 5
      %p139 = scmp.ne.s32.totalorder %s134, %s136
      %p140 = scmp.eq.s32.totalorder %s21, 0
      %p141 = por %p139, %p140
      %p142 = scmp.ne.s32.totalorder %s134, %s136
      %p143 = scmp.eq.s32.totalorder %s26, 5
      %p144 = por %p142, %p143
      %p145 = scmp.ne.s32.totalorder %s136, %s137
      %p146 = scmp.eq.s32.totalorder %s26, 0
      %p147 = por %p145, %p146
      %p148 = scmp.ne.s32.totalorder %s136, %s137
      %p149 = scmp.eq.s32.totalorder %s27, 5
      %p150 = por %p148, %p149
      %p152 = scmp.ne.s32.totalorder %s137, %s151
      %p153 = scmp.eq.s32.totalorder %s27, 0
      %p154 = por %p152, %p153
      %s156 = sadd.s32 %s155, 1
      %p159 = scmp.eq.s32.totalorder %s21, 5
      %p160 = scmp.ne.s32.totalorder %s155, %s157
      %p161 = scmp.eq.s32.totalorder %s21, 0
      %p162 = por %p160, %p161
      %p163 = scmp.ne.s32.totalorder %s155, %s157
      %p164 = scmp.eq.s32.totalorder %s26, 5
      %p165 = por %p163, %p164
      %p166 = scmp.ne.s32.totalorder %s157, %s158
      %p167 = scmp.eq.s32.totalorder %s26, 0
      %p168 = por %p166, %p167
      %p169 = scmp.ne.s32.totalorder %s157, %s158
      %p170 = scmp.eq.s32.totalorder %s27, 5
      %p171 = por %p169, %p170
      %p173 = scmp.ne.s32.totalorder %s158, %s172
      %p174 = scmp.eq.s32.totalorder %s27, 0
      %p175 = por %p173, %p174
      %s177 = sadd.s32 %s176, 1
      %p180 = scmp.eq.s32.totalorder %s21, 5
      %p181 = scmp.ne.s32.totalorder %s176, %s178
      %p182 = scmp.eq.s32.totalorder %s21, 0
      %p183 = por %p181, %p182
      %p184 = scmp.ne.s32.totalorder %s176, %s178
      %p185 = scmp.eq.s32.totalorder %s26, 5
      %p186 = por %p184, %p185
      %p187 = scmp.ne.s32.totalorder %s178, %s179
      %p188 = scmp.eq.s32.totalorder %s26, 0
      %p189 = por %p187, %p188
      %p190 = scmp.ne.s32.totalorder %s178, %s179
      %p191 = scmp.eq.s32.totalorder %s27, 5
      %p192 = por %p190, %p191
      %p194 = scmp.ne.s32.totalorder %s179, %s193
      %p195 = scmp.eq.s32.totalorder %s27, 0
      %p196 = por %p194, %p195
      %s198 = sadd.s32 %s197, 1
      %p201 = scmp.eq.s32.totalorder %s21, 5
      %p202 = scmp.ne.s32.totalorder %s197, %s199
      %p203 = scmp.eq.s32.totalorder %s21, 0
      %p204 = por %p202, %p203
      %p205 = scmp.ne.s32.totalorder %s197, %s199
      %p206 = scmp.eq.s32.totalorder %s26, 5
      %p207 = por %p205, %p206
      %p208 = scmp.ne.s32.totalorder %s199, %s200
      %p209 = scmp.eq.s32.totalorder %s26, 0
      %p210 = por %p208, %p209
      %p211 = scmp.ne.s32.totalorder %s199, %s200
      %p212 = scmp.eq.s32.totalorder %s27, 5
      %p213 = por %p211, %p212
      %p215 = scmp.ne.s32.totalorder %s200, %s214
      %p216 = scmp.eq.s32.totalorder %s27, 0
      %p217 = por %p215, %p216
      %s219 = sadd.s32 %s218, 1
      %p222 = scmp.eq.s32.totalorder %s21, 5
      %p223 = scmp.ne.s32.totalorder %s218, %s220
      %p224 = scmp.eq.s32.totalorder %s21, 0
      %p225 = por %p223, %p224
      %p226 = scmp.ne.s32.totalorder %s218, %s220
      %p227 = scmp.eq.s32.totalorder %s26, 5
      %p228 = por %p226, %p227
      %p229 = scmp.ne.s32.totalorder %s220, %s221
      %p230 = scmp.eq.s32.totalorder %s26, 0
      %p231 = por %p229, %p230
      %p232 = scmp.ne.s32.totalorder %s220, %s221
      %p233 = scmp.eq.s32.totalorder %s27, 5
      %p234 = por %p232, %p233
      %p236 = scmp.ne.s32.totalorder %s221, %s235
      %p237 = scmp.eq.s32.totalorder %s27, 0
      %p238 = por %p236, %p237
      %s240 = sadd.s32 %s239, 1
      %p243 = scmp.eq.s32.totalorder %s21, 5
      %p244 = scmp.ne.s32.totalorder %s239, %s241
      %p245 = scmp.eq.s32.totalorder %s21, 0
      %p246 = por %p244, %p245
      %p247 = scmp.ne.s32.totalorder %s239, %s241
      %p248 = scmp.eq.s32.totalorder %s26, 5
      %p249 = por %p247, %p248
      %p250 = scmp.ne.s32.totalorder %s241, %s242
      %p251 = scmp.eq.s32.totalorder %s26, 0
      %p252 = por %p250, %p251
      %p253 = scmp.ne.s32.totalorder %s241, %s242
      %p254 = scmp.eq.s32.totalorder %s27, 5
      %p255 = por %p253, %p254
      %p257 = scmp.ne.s32.totalorder %s242, %s256
      %p258 = scmp.eq.s32.totalorder %s27, 0
      %p259 = por %p257, %p258
      %s261 = sadd.s32 %s260, 1
      %p264 = scmp.eq.s32.totalorder %s21, 5
      %p265 = scmp.ne.s32.totalorder %s260, %s262
      %p266 = scmp.eq.s32.totalorder %s21, 0
      %p267 = por %p265, %p266
      %p268 = scmp.ne.s32.totalorder %s260, %s262
      %p269 = scmp.eq.s32.totalorder %s26, 5
      %p270 = por %p268, %p269
      %p271 = scmp.ne.s32.totalorder %s262, %s263
      %p272 = scmp.eq.s32.totalorder %s26, 0
      %p273 = por %p271, %p272
      %p274 = scmp.ne.s32.totalorder %s262, %s263
      %p275 = scmp.eq.s32.totalorder %s27, 5
      %p276 = por %p274, %p275
      %p278 = scmp.ne.s32.totalorder %s263, %s277
      %p279 = scmp.eq.s32.totalorder %s27, 0
      %p280 = por %p278, %p279
      %s281 = ssub.s32 %s21, %s28
      %p282 = scmp.eq.s32.totalorder %s281, 0
      %s284 = sadd.s32 %s283, 1
      %s285 = scalar_select %p282, %s283, %s284
      %p288 = pneg %p282
      %p289 = scmp.eq.s32.totalorder %s21, 5
      %p290 = por %p288, %p289
      %p291 = scmp.ne.s32.totalorder %s283, %s286
      %p292 = scmp.eq.s32.totalorder %s21, 0
      %p293 = por %p291, %p292
      %p294 = scmp.ne.s32.totalorder %s283, %s286
      %p295 = scmp.eq.s32.totalorder %s26, 5
      %p296 = por %p294, %p295
      %p297 = scmp.ne.s32.totalorder %s286, %s287
      %p298 = scmp.eq.s32.totalorder %s26, 0
      %p299 = por %p297, %p298
      %p300 = scmp.ne.s32.totalorder %s286, %s287
      %p301 = scmp.eq.s32.totalorder %s27, 5
      %p302 = por %p300, %p301
      %p304 = scmp.ne.s32.totalorder %s287, %s303
      %p305 = scmp.eq.s32.totalorder %s27, 0
      %p306 = por %p304, %p305
      %p307 = scmp.le.s32.totalorder 1, %s21
      %p308 = scmp.lt.s32.totalorder %s21, 7
      %p309 = pnand %p307, %p308
      %p310 = pneg %p309
      // Predicated region
      $region9: #{_lambda_.3} parent=5 // pred_check
        _
      $region10: #{_lambda_.3} parent=5 // pred_check_branch
        %312 = sbr.rel (%p309) target = $region12
      $region11: #{_lambda_.3} parent=5 // pred_region
        %s313 = ssub.s32 %s21, 1
        // Predicated region
        $region13: #{_lambda_.3} parent=11 // pred_check
          %p314 = pneg %p42
        $region14: #{_lambda_.3} parent=11 // pred_check_branch
          %316 = sbr.rel (%p314) target = $region16
        $region15: #{_lambda_.3} parent=11 // pred_region
          _
        $region16: #{_lambda_.3} parent=11 // pred_fallthru
          _
        // Predicated region
        $region17: #{_lambda_.3} parent=11 // pred_check
          %p317 = pneg %p63
        $region18: #{_lambda_.3} parent=11 // pred_check_branch
          %319 = sbr.rel (%p317) target = $region20
        $region19: #{_lambda_.3} parent=11 // pred_region
          _
        $region20: #{_lambda_.3} parent=11 // pred_fallthru
          _
        // Predicated region
        $region21: #{_lambda_.3} parent=11 // pred_check
          %p320 = pneg %p84
        $region22: #{_lambda_.3} parent=11 // pred_check_branch
          %322 = sbr.rel (%p320) target = $region24
        $region23: #{_lambda_.3} parent=11 // pred_region
          _
        $region24: #{_lambda_.3} parent=11 // pred_fallthru
          _
        // Predicated region
        $region25: #{_lambda_.3} parent=11 // pred_check
          %p323 = pneg %p105
        $region26: #{_lambda_.3} parent=11 // pred_check_branch
          %325 = sbr.rel (%p323) target = $region28
        $region27: #{_lambda_.3} parent=11 // pred_region
          _
        $region28: #{_lambda_.3} parent=11 // pred_fallthru
          _
        // Predicated region
        $region29: #{_lambda_.3} parent=11 // pred_check
          %p326 = pneg %p126
        $region30: #{_lambda_.3} parent=11 // pred_check_branch
          %328 = sbr.rel (%p326) target = $region32
        $region31: #{_lambda_.3} parent=11 // pred_region
          _
        $region32: #{_lambda_.3} parent=11 // pred_fallthru
          _
        // Predicated region
        $region33: #{_lambda_.3} parent=11 // pred_check
          %p329 = pneg %p147
        $region34: #{_lambda_.3} parent=11 // pred_check_branch
          %331 = sbr.rel (%p329) target = $region36
        $region35: #{_lambda_.3} parent=11 // pred_region
          _
        $region36: #{_lambda_.3} parent=11 // pred_fallthru
          _
        // Predicated region
        $region37: #{_lambda_.3} parent=11 // pred_check
          %p332 = pneg %p168
        $region38: #{_lambda_.3} parent=11 // pred_check_branch
          %334 = sbr.rel (%p332) target = $region40
        $region39: #{_lambda_.3} parent=11 // pred_region
          _
        $region40: #{_lambda_.3} parent=11 // pred_fallthru
          _
        // Predicated region
        $region41: #{_lambda_.3} parent=11 // pred_check
          %p335 = pneg %p189
        $region42: #{_lambda_.3} parent=11 // pred_check_branch
          %337 = sbr.rel (%p335) target = $region44
        $region43: #{_lambda_.3} parent=11 // pred_region
          _
        $region44: #{_lambda_.3} parent=11 // pred_fallthru
          _
        // Predicated region
        $region45: #{_lambda_.3} parent=11 // pred_check
          %p338 = pneg %p210
        $region46: #{_lambda_.3} parent=11 // pred_check_branch
          %340 = sbr.rel (%p338) target = $region48
        $region47: #{_lambda_.3} parent=11 // pred_region
          _
        $region48: #{_lambda_.3} parent=11 // pred_fallthru
          _
        // Predicated region
        $region49: #{_lambda_.3} parent=11 // pred_check
          %p341 = pneg %p231
        $region50: #{_lambda_.3} parent=11 // pred_check_branch
          %343 = sbr.rel (%p341) target = $region52
        $region51: #{_lambda_.3} parent=11 // pred_region
          _
        $region52: #{_lambda_.3} parent=11 // pred_fallthru
          _
        // Predicated region
        $region53: #{_lambda_.3} parent=11 // pred_check
          %p344 = pneg %p252
        $region54: #{_lambda_.3} parent=11 // pred_check_branch
          %346 = sbr.rel (%p344) target = $region56
        $region55: #{_lambda_.3} parent=11 // pred_region
          _
        $region56: #{_lambda_.3} parent=11 // pred_fallthru
          _
        // Predicated region
        $region57: #{_lambda_.3} parent=11 // pred_check
          %p347 = pneg %p273
        $region58: #{_lambda_.3} parent=11 // pred_check_branch
          %349 = sbr.rel (%p347) target = $region60
        $region59: #{_lambda_.3} parent=11 // pred_region
          _
        $region60: #{_lambda_.3} parent=11 // pred_fallthru
          _
      $region12: #{_lambda_.3} parent=5 // pred_fallthru
        _
      %p350 = scmp.lt.s32.totalorder %s21, 6
      // Predicated region
      $region61: #{_lambda_.3} parent=5 // pred_check
        %p351 = pneg %p350
      $region62: #{_lambda_.3} parent=5 // pred_check_branch
        %353 = sbr.rel (%p351) target = $region64
      $region63: #{_lambda_.3} parent=5 // pred_region
        _
      $region64: #{_lambda_.3} parent=5 // pred_fallthru
        _
      %p354 = scmp.le.s32.totalorder 1, %s21
      %p355 = scmp.lt.s32.totalorder %s21, 7
      %p356 = pnand %p354, %p355
      %p357 = pneg %p356
      // Predicated region
      $region65: #{_lambda_.3} parent=5 // pred_check
        _
      $region66: #{_lambda_.3} parent=5 // pred_check_branch
        %359 = sbr.rel (%p356) target = $region68
      $region67: #{_lambda_.3} parent=5 // pred_region
        %s360 = ssub.s32 %s21, 1
        %p361 = pneg %p42
        %p362 = pneg %p39
        %p363 = pneg %p63
        %p364 = pneg %p60
        %p365 = pneg %p84
        %p366 = pneg %p81
        %p367 = pneg %p105
        %p368 = pneg %p102
        %p369 = pneg %p126
        %p370 = pneg %p123
        %p371 = pneg %p147
        %p372 = pneg %p144
        %p373 = pneg %p168
        %p374 = pneg %p165
        %p375 = pneg %p189
        %p376 = pneg %p186
        %p377 = pneg %p210
        %p378 = pneg %p207
        %p379 = pneg %p231
        %p380 = pneg %p228
        %p381 = pneg %p252
        %p382 = pneg %p249
        %p383 = pneg %p273
        %p384 = pneg %p270
        %p385 = pneg %p299
        %p386 = pneg %p296
        %s387 = sand.u32 %s286, 1
        %s388 = scalar_lea.sflag [#allocation6], %s387
        %s389 = sand.u32 %s286, 1
        %s390 = smul.addr %s389, 2
        %s391 = scalar_lea.vmem [#allocation5], %s390
        %p393 = scmp.eq.s32.totalorder %s26, 0
        // Predicated region
        $region69: #{_lambda_.3} parent=67 // pred_check
          %p394 = pneg %p393
        $region70: #{_lambda_.3} parent=67 // pred_check_branch
          %396 = sbr.rel (%p394) target = $region72
        $region71: #{_lambda_.3} parent=67 // pred_region
          %v397 = vld [vmem:[%s1] sm:$0x3]
          %vm398 = vcmask 254976
          %399 = vst.msk [vmem:[#allocation2] sm:$0x3] %vm398, %v397
          %v400 = vld [vmem:[%s2] sm:$0x3]
          %401 = vst.msk [vmem:[#allocation3] sm:$0x3] %vm398, %v400
          %v402 = vld [vmem:[%s0] sm:$0x1]
          %vm403 = vcmask 122880
          %404 = vst.msk [vmem:[#allocation4] sm:$0x1] %vm403, %v402
        $region72: #{_lambda_.3} parent=67 // pred_fallthru
          _
        %v405 = vld [vmem:[#allocation4] sm:$0x1]
        %v406 = vld [vmem:[#allocation2] sm:$0x3]
        %v407 = vld [vmem:[#allocation3] sm:$0x3]
        %v408 = vld [vmem:[%s5] sm:$0xf]
        %v409 = vld [vmem:[%s5 + $0x4] sm:$0xf]
        %v410 = vpack.c.bf16 %v406, %v406
        %v411 = vld [vmem:[%s6] sm:$0xf]
        %v412 = vld [vmem:[%s6 + $0x4] sm:$0xf]
        %v413 = vld [vmem:[%s6 + $0x8] sm:$0xf]
        %v414 = vld [vmem:[%s6 + $0xc] sm:$0xf]
        %v419 = vunpack.c.l.b16 %v411
        %v420 = vunpack.c.l.b16 %v412
        %v421 = vunpack.c.l.b16 %v413
        %v422 = vunpack.c.l.b16 %v414
        %v423 = vpack.c.b16 %v420, %v419
        %v424 = vpack.c.b16 %v422, %v421
        %vm427 = vcmask 261120
        %v429 = vsel %vm427, %v410, 0
        %431 = vmatpush.bf16.msra.mxu0 0
        %432 = vmatpush.bf16.msra.mxu0 0
        %433 = vmatpush.bf16.msra.mxu0 0
        %434 = vmatpush.bf16.msra.mxu0 0
        %435 = vmatpush.bf16.msra.mxu0 0
        %436 = vmatpush.bf16.msra.mxu0 0
        %437 = vmatpush.bf16.msra.mxu0 %v424
        %438 = vmatpush.bf16.msra.mxu0 %v423
        %439 = vmatmul.bf16.gmra.mxu0 %v429
        %v440 = vpop.f32.mrf.mxu0
        %v441 = vadd.f32 0.0, %v440
        %v442 = vpop.f32.mrf.mxu0
        %443 = vdwg.mxu0
        %v446 = vunpack.c.l.b16 %v408
        %v447 = vunpack.c.l.b16 %v409
        %v448 = vpack.c.b16 %v447, %v446
        %vm450 = vcmask 130048
        %v452 = vsel %vm450, %v405, 0
        %454 = vmatpush.bf16.msra.mxu0 0
        %455 = vmatpush.bf16.msra.mxu0 0
        %456 = vmatpush.bf16.msra.mxu0 0
        %457 = vmatpush.bf16.msra.mxu0 0
        %458 = vmatpush.bf16.msra.mxu0 0
        %459 = vmatpush.bf16.msra.mxu0 0
        %460 = vmatpush.bf16.msra.mxu0 0
        %461 = vmatpush.bf16.msra.mxu0 %v448
        %462 = vmatmul.bf16.gmra.mxu0 %v452
        %v463 = vpop.f32.mrf.mxu0
        %v464 = vadd.f32 %v441, %v463
        %v465 = vpop.f32.mrf.mxu0
        %466 = vdwg.mxu0
        %v467 = vld [vmem:[%s7] sm:$0x1]
        %v469 = vperm.slane %v467, 0
        %v471 = vadd.f32 %v464, %v469
        %v472 = vxor.u32 %v471, 2147483648
        %v473 = vmul.f32 %v472, 1.442695
        %v474 = vpow.pop %v473
        %v475 = vadd.f32 %v474, 1.0
        %v476 = vrcp.pop %v475
        %v477 = vmul.f32 %v475, %v476
        %v478 = vsub.f32 1.0, %v477
        %v479 = vmul.f32 %v476, %v478
        %v480 = vadd.f32 %v476, %v479
        %vm481 = vweird.f32 %v475
        %vm482 = vweird.f32 %v476
        %vm483 = vmor %vm481, %vm482
        %v484 = vsel %vm483, %v476, %v480
        %v485 = vand.u32 2147483647, %v475
        %vm486 = vcmp.eq.f32.partialorder %v485, 8.507059e+37
        %v487 = vand.u32 %v475, 2147483648
        %v488 = vor.u32 1.1754944e-38, %v487
        %v489 = vsel %vm486, %v488, %v484
        %v490 = vmul.f32 1.0, %v489
        %v491 = vtanh.pop %v471
        %493 = vrot.lane.b32.xlu0 %v407, 32
        %v494 = vpop.permute.xlu0 %493
        %v496 = vmul.f32 %v490, %v494
        %498 = vrot.lane.b32.xlu0 %v491, 64
        %v499 = vpop.permute.xlu0 %498
        %v501 = vmul.f32 %v490, %v499
        %503 = vrot.lane.b32.xlu0 %v501, 32
        %v504 = vpop.permute.xlu0 %503
        %v506 = vadd.f32 %v496, %v504
        %v507 = vtanh.pop %v506
        %509 = vrot.lane.b32.xlu0 %v507, 64
        %v510 = vpop.permute.xlu0 %509
        %v512 = vmul.f32 %v490, %v510
        %514 = vrot.lane.b32.xlu0 %v512, 32
        %v515 = vpop.permute.xlu0 %514
        %vm517 = vcmask 254976
        %518 = vst.msk [vmem:[#allocation2] sm:$0x3] %vm517, %v515
        %520 = vrot.lane.b32.xlu0 %v506, 96
        %v521 = vpop.permute.xlu0 %520
        %523 = vst.msk [vmem:[#allocation3] sm:$0x3] %vm517, %v521
        %v524 = vpack.c.bf16 %v512, %v512
        %v525 = vld [vmem:[%s3] sm:$0xf]
        %v526 = vld [vmem:[%s3 + $0x4] sm:$0xf]
        %v527 = vld [vmem:[%s8] sm:$0xf]
        %v528 = vld [vmem:[%s8 + $0x4] sm:$0xf]
        %v529 = vld [vmem:[%s8 + $0x8] sm:$0xf]
        %v530 = vld [vmem:[%s8 + $0xc] sm:$0xf]
        %532 = vrot.lane.b32.xlu0 %v524, 32
        %v533 = vpop.permute.xlu0 %532
        %v538 = vunpack.c.l.b16 %v527
        %v539 = vunpack.c.l.b16 %v528
        %v540 = vunpack.c.l.b16 %v529
        %v541 = vunpack.c.l.b16 %v530
        %v542 = vpack.c.b16 %v539, %v538
        %v543 = vpack.c.b16 %v541, %v540
        %v547 = vsel %vm427, %v533, 0
        %549 = vmatpush.bf16.msra.mxu0 0
        %550 = vmatpush.bf16.msra.mxu0 0
        %551 = vmatpush.bf16.msra.mxu0 0
        %552 = vmatpush.bf16.msra.mxu0 0
        %553 = vmatpush.bf16.msra.mxu0 0
        %554 = vmatpush.bf16.msra.mxu0 0
        %555 = vmatpush.bf16.msra.mxu0 %v543
        %556 = vmatpush.bf16.msra.mxu0 %v542
        %557 = vmatmul.bf16.gmra.mxu0 %v547
        %v558 = vpop.f32.mrf.mxu0
        %v559 = vadd.f32 0.0, %v558
        %v560 = vpop.f32.mrf.mxu0
        %561 = vdwg.mxu0
        %v562 = vpack.c.bf16 %v559, %v559
        %v564 = vrot.slane %v562, 3
        %vm565 = vcmask 1040384
        %v568 = vsel %vm565, %v562, %v564
        %v570 = vunpack.i.l.s16 %v568
        %v571 = vunpack.i.h.s16 %v568
        %v572 = vpack.i.b16 %v570, %v570
        %v573 = vperm.slane %v572, 0
        %v575 = vsel %vm427, %v573, 0
        %v578 = vsel %vm427, %v525, 0
        %580 = vmatpush.bf16.xpose.msra.mxu0 0
        %581 = vmatpush.bf16.xpose.msra.mxu0 0
        %582 = vmatpush.bf16.xpose.msra.mxu0 0
        %583 = vmatpush.bf16.xpose.msra.mxu0 0
        %584 = vmatpush.bf16.xpose.msra.mxu0 0
        %585 = vmatpush.bf16.xpose.msra.mxu0 0
        %586 = vmatpush.bf16.xpose.msra.mxu0 0
        %587 = vmatpush.bf16.xpose.msra.mxu0 %v578
        %588 = vmatmul.bf16.gmra.mxu0 %v575
        %v589 = vpop.f32.mrf.mxu0
        %v590 = vadd.f32 0.0, %v589
        %v591 = vpop.f32.mrf.mxu0
        %592 = vdwg.mxu0
        %v593 = vpack.i.b16 %v571, %v571
        %v594 = vperm.slane %v593, 0
        %v596 = vsel %vm427, %v594, 0
        %v599 = vsel %vm427, %v526, 0
        %601 = vmatpush.bf16.xpose.msra.mxu0 0
        %602 = vmatpush.bf16.xpose.msra.mxu0 0
        %603 = vmatpush.bf16.xpose.msra.mxu0 0
        %604 = vmatpush.bf16.xpose.msra.mxu0 0
        %605 = vmatpush.bf16.xpose.msra.mxu0 0
        %606 = vmatpush.bf16.xpose.msra.mxu0 0
        %607 = vmatpush.bf16.xpose.msra.mxu0 0
        %608 = vmatpush.bf16.xpose.msra.mxu0 %v599
        %609 = vmatmul.bf16.gmra.mxu0 %v596
        %v610 = vpop.f32.mrf.mxu0
        %v611 = vadd.f32 0.0, %v610
        %v612 = vpop.f32.mrf.mxu0
        %613 = vdwg.mxu0
        %vm614 = vcmask 57344
        %v615 = vsel %vm614, %v590, -inf
        %616 = vmax.xlane.f32.xlu0 %v615
        %v617 = vpop.xlane.xlu0 %616
        %v618 = vsel %vm614, %v611, -inf
        %619 = vmax.xlane.f32.xlu0 %v618
        %v620 = vpop.xlane.xlu0 %619
        %v621 = vsub.f32 %v590, %v617
        %v622 = vsub.f32 %v611, %v620
        %v623 = vmul.f32 %v621, 1.442695
        %v624 = vpow.pop %v623
        %v625 = vmul.f32 %v622, 1.442695
        %v626 = vpow.pop %v625
        %v627 = vsel %vm614, %v624, 0.0
        %628 = vadd.xlane.f32.xlu0 %v627
        %v629 = vpop.xlane.xlu0 %628
        %v630 = vsel %vm614, %v626, 0.0
        %631 = vadd.xlane.f32.xlu0 %v630
        %v632 = vpop.xlane.xlu0 %631
        %v633 = vrcp.pop %v629
        %v634 = vrcp.pop %v632
        %v635 = vmul.f32 %v624, %v633
        %v636 = vmul.f32 %v626, %v634
        %v637 = vpack.c.bf16 %v635, %v635
        %v638 = vpack.c.bf16 %v636, %v636
        %vm639 = vcmask 64512
        %v641 = vsel %vm639, %v637, 0
        %vm643 = vcmask 1043456
        %v644 = vsel %vm643, %v525, 0
        %646 = vmatpush.bf16.msra.mxu0 0
        %647 = vmatpush.bf16.msra.mxu0 0
        %648 = vmatpush.bf16.msra.mxu0 0
        %649 = vmatpush.bf16.msra.mxu0 0
        %650 = vmatpush.bf16.msra.mxu0 0
        %651 = vmatpush.bf16.msra.mxu0 0
        %652 = vmatpush.bf16.msra.mxu0 0
        %653 = vmatpush.bf16.msra.mxu0 %v644
        %654 = vmatmul.bf16.gmra.mxu0 %v641
        %v655 = vpop.f32.mrf.mxu0
        %v656 = vadd.f32 0.0, %v655
        %v657 = vpop.f32.mrf.mxu0
        %658 = vdwg.mxu0
        %v660 = vsel %vm639, %v638, 0
        %v662 = vsel %vm643, %v526, 0
        %664 = vmatpush.bf16.msra.mxu0 0
        %665 = vmatpush.bf16.msra.mxu0 0
        %666 = vmatpush.bf16.msra.mxu0 0
        %667 = vmatpush.bf16.msra.mxu0 0
        %668 = vmatpush.bf16.msra.mxu0 0
        %669 = vmatpush.bf16.msra.mxu0 0
        %670 = vmatpush.bf16.msra.mxu0 0
        %671 = vmatpush.bf16.msra.mxu0 %v662
        %672 = vmatmul.bf16.gmra.mxu0 %v660
        %v673 = vpop.f32.mrf.mxu0
        %v674 = vadd.f32 0.0, %v673
        %v675 = vpop.f32.mrf.mxu0
        %676 = vdwg.mxu0
        %v677 = vld [vmem:[%s9] sm:$0xf]
        %v678 = vld [vmem:[%s9 + $0x4] sm:$0xf]
        %v679 = vld [vmem:[%s9 + $0x8] sm:$0xf]
        %v680 = vld [vmem:[%s9 + $0xc] sm:$0xf]
        %v681 = vld [vmem:[%s9 + $0x10] sm:$0xf]
        %v682 = vld [vmem:[%s9 + $0x14] sm:$0xf]
        %v683 = vld [vmem:[%s9 + $0x18] sm:$0xf]
        %v684 = vld [vmem:[%s9 + $0x1c] sm:$0xf]
        %v685 = vpack.c.bf16 %v656, %v656
        %v686 = vpack.c.bf16 %v674, %v674
        %v691 = vunpack.c.l.b16 %v681
        %v692 = vunpack.c.l.b16 %v682
        %v693 = vunpack.c.l.b16 %v683
        %v694 = vunpack.c.l.b16 %v684
        %v695 = vpack.c.b16 %v692, %v691
        %v696 = vpack.c.b16 %v694, %v693
        %699 = vmatpush.bf16.msra.mxu0 0
        %700 = vmatpush.bf16.msra.mxu0 0
        %701 = vmatpush.bf16.msra.mxu0 0
        %702 = vmatpush.bf16.msra.mxu0 0
        %703 = vmatpush.bf16.msra.mxu0 0
        %704 = vmatpush.bf16.msra.mxu0 0
        %705 = vmatpush.bf16.msra.mxu0 %v696
        %706 = vmatpush.bf16.msra.mxu0 %v695
        %707 = vmatmul.bf16.gmra.mxu0 %v547
        %v708 = vpop.f32.mrf.mxu0
        %v709 = vadd.f32 0.0, %v708
        %v710 = vpop.f32.mrf.mxu0
        %711 = vdwg.mxu0
        %v714 = vunpack.c.l.b16 %v685
        %v715 = vunpack.c.l.b16 %v686
        %v716 = vrot.slane %v715, 7
        %vm717 = vcmask 1041409
        %v718 = vsel %vm717, %v716, %v714
        %v719 = vpack.c.b16 %v718, %v718
        %v724 = vunpack.c.l.b16 %v677
        %v725 = vunpack.c.l.b16 %v678
        %v726 = vunpack.c.l.b16 %v679
        %v727 = vunpack.c.l.b16 %v680
        %v728 = vpack.c.b16 %v725, %v724
        %v729 = vpack.c.b16 %v727, %v726
        %v733 = vsel %vm427, %v719, 0
        %735 = vmatpush.bf16.msra.mxu0 0
        %736 = vmatpush.bf16.msra.mxu0 0
        %737 = vmatpush.bf16.msra.mxu0 0
        %738 = vmatpush.bf16.msra.mxu0 0
        %739 = vmatpush.bf16.msra.mxu0 0
        %740 = vmatpush.bf16.msra.mxu0 0
        %741 = vmatpush.bf16.msra.mxu0 %v729
        %742 = vmatpush.bf16.msra.mxu0 %v728
        %743 = vmatmul.bf16.gmra.mxu0 %v733
        %v744 = vpop.f32.mrf.mxu0
        %v745 = vadd.f32 %v709, %v744
        %v746 = vpop.f32.mrf.mxu0
        %747 = vdwg.mxu0
        %v748 = vtanh.pop %v745
        %v749 = vpack.c.bf16 %v748, %v748
        %v750 = vld [vmem:[%s10] sm:$0xf]
        %v751 = vld [vmem:[%s10 + $0x4] sm:$0xf]
        %v752 = vld [vmem:[%s10 + $0x8] sm:$0xf]
        %v753 = vld [vmem:[%s10 + $0xc] sm:$0xf]
        %v754 = vld [vmem:[%s11] sm:$0x1]
        %v756 = vperm.slane %v754, 0
        %v762 = vunpack.c.l.b16 %v750
        %v763 = vunpack.c.l.b16 %v751
        %v764 = vunpack.c.l.b16 %v752
        %v765 = vunpack.c.l.b16 %v753
        %v766 = vpack.c.b16 %v763, %v762
        %v767 = vpack.c.b16 %v765, %v764
        %v771 = vsel %vm427, %v749, 0
        %773 = vmatpush.bf16.msra.mxu0 0
        %774 = vmatpush.bf16.msra.mxu0 0
        %775 = vmatpush.bf16.msra.mxu0 0
        %776 = vmatpush.bf16.msra.mxu0 0
        %777 = vmatpush.bf16.msra.mxu0 0
        %778 = vmatpush.bf16.msra.mxu0 0
        %779 = vmatpush.bf16.msra.mxu0 %v767
        %780 = vmatpush.bf16.msra.mxu0 %v766
        %781 = vmatmul.bf16.gmra.mxu0 %v771
        %v782 = vpop.f32.mrf.mxu0
        %v783 = vadd.f32 %v756, %v782
        %v784 = vpop.f32.mrf.mxu0
        %785 = vdwg.mxu0
        %786 = vst [vmem:[%s391] sm:$0x3] %v783
        %v787 = vlaneseq
        %v788 = vand.u32 %v787, 127
        %vm789 = vcmask 1041408
        %v790 = vsel %vm789, %v783, -inf
        %791 = vmax.xlane.f32.xlu0 %v790
        %v792 = vpop.xlane.xlu0 %791
        %vm793 = vcmp.eq.f32.partialorder %v783, %v792
        %v794 = vsel %vm793, %v788, 128
        %v795 = vsel %vm789, %v794, 2147483647
        %v796 = vand.u32 %v795, 65535
        %v797 = vshra.s32 %v795, 16
        %v798 = vcvt.s32.f32 %v796
        %v799 = vcvt.s32.f32 %v797
        %800 = vmin.xlane.f32.xlu0 %v799
        %v801 = vpop.xlane.xlu0 %800
        %vm802 = vcmp.eq.f32.partialorder %v799, %v801
        %v803 = vsel %vm802, %v798, inf
        %804 = vmin.xlane.f32.xlu0 %v803
        %v805 = vpop.xlane.xlu0 %804
        %v806 = vcvt.f32.s32 %v805
        %v807 = vcvt.f32.s32 %v801
        %v808 = vshll.u32 %v807, 16
        %v809 = vadd.s32 %v808, %v806
        %vm810 = vcmp.eq.s32.totalorder %v788, %v809
        %v811 = vsel %vm810, 1, 0
        %v812 = vcvt.s32.f32 %v811
        %v813 = vpack.c.bf16 %v812, %v812
        %v814 = vld [vmem:[%s4] sm:$0xf]
        %v815 = vld [vmem:[%s4 + $0x4] sm:$0xf]
        %v816 = vld [vmem:[%s4 + $0x8] sm:$0xf]
        %v817 = vld [vmem:[%s4 + $0xc] sm:$0x3]
        %v822 = vunpack.c.l.b16 %v814
        %v823 = vunpack.c.l.b16 %v815
        %v824 = vunpack.c.l.b16 %v816
        %v825 = vunpack.c.l.b16 %v817
        %v826 = vpack.c.b16 %v823, %v822
        %v827 = vpack.c.b16 %v825, %v824
        %vm829 = vcmask 228352
        %v831 = vsel %vm829, %v813, 0
        %vm833 = vcmask 1045504
        %v835 = vsel %vm833, %v827, 0
        %837 = vmatpush.bf16.msra.mxu0 0
        %838 = vmatpush.bf16.msra.mxu0 0
        %839 = vmatpush.bf16.msra.mxu0 0
        %840 = vmatpush.bf16.msra.mxu0 0
        %841 = vmatpush.bf16.msra.mxu0 0
        %842 = vmatpush.bf16.msra.mxu0 0
        %843 = vmatpush.bf16.msra.mxu0 %v835
        %844 = vmatpush.bf16.msra.mxu0 %v826
        %845 = vmatmul.bf16.gmra.mxu0 %v831
        %v846 = vpop.f32.mrf.mxu0
        %v847 = vadd.f32 0.0, %v846
        %v848 = vpop.f32.mrf.mxu0
        %849 = vdwg.mxu0
        %v850 = vpack.c.bf16 %v847, %v847
        %vm851 = vcmask 122880
        %852 = vst.msk [vmem:[#allocation4] sm:$0x1] %vm851, %v850
        %s853 = sand.u32 %s286, 1
        %s854 = scalar_lea.sflag [#allocation6], %s853
        %s855 = sand.u32 %s286, 1
        %s856 = smul.addr %s855, 2
        %s857 = scalar_lea.vmem [#allocation5], %s856
        // Predicated region
        $region73: #{_lambda_.3} parent=67 // pred_check
          %p858 = pneg %p296
        $region74: #{_lambda_.3} parent=67 // pred_check_branch
          %860 = sbr.rel (%p858) target = $region76
        $region75: #{_lambda_.3} parent=67 // pred_region
          %862 = vsyncadd %s854, 0
          %s863 = smul.addr %s26, 2
          %s864 = scalar_lea.hbm %s12, %s863
          %s866 = sshll.u32 %s857, 4
          %s867 = int_to_ptr.vmem [resolvable:$true] %s866
          %s868 = sshll.u32 %s864, 4
          %s869 = int_to_ptr.hbm [resolvable:$true] %s868
          %871 = dma.vmem_to_hbm [thread:$0]  %s867, 32, %s869, %s854
        $region76: #{_lambda_.3} parent=67 // pred_fallthru
          _
      $region68: #{_lambda_.3} parent=5 // pred_fallthru
        _
      %p872 = scmp.le.s32.totalorder 2, %s21
      // Predicated region
      $region77: #{_lambda_.3} parent=5 // pred_check
        %p873 = pneg %p872
      $region78: #{_lambda_.3} parent=5 // pred_check_branch
        %875 = sbr.rel (%p873) target = $region80
      $region79: #{_lambda_.3} parent=5 // pred_region
        %s876 = ssub.s32 %s21, 2
        // Predicated region
        $region81: #{_lambda_.3} parent=79 // pred_check
          %p877 = pneg %p302
        $region82: #{_lambda_.3} parent=79 // pred_check_branch
          %879 = sbr.rel (%p877) target = $region84
        $region83: #{_lambda_.3} parent=79 // pred_region
          %s880 = sand.u32 %s287, 1
          %s881 = scalar_lea.sflag [#allocation6], %s880
          %s882 = sand.u32 %s287, 1
          %s883 = smul.addr %s882, 2
          %s884 = scalar_lea.vmem [#allocation5], %s883
          %886 = dma.done %s881, 32
        $region84: #{_lambda_.3} parent=79 // pred_fallthru
          _
      $region80: #{_lambda_.3} parent=5 // pred_fallthru
        _
    $region6: #{_lambda_.3} parent=1 // loop_footer
      %s25 = sadd.s32 1, %s21
    $region7: #{_lambda_.3} parent=1 // loop_footer_branch
      %20 = sbr.rel target = $region3
    $region8: #{_lambda_.3} parent=1 // loop_exit
      _
    %887 = vsyncpa [#allocation6], 1
    %s888 = scalar_lea.sflag [#allocation6], 1
    %889 = vsyncpa %s888, 1

</llo_original>
